<compile_context>
chip_gen: v7x
topology: tpu7x:2x2x1
jax: 0.10.0
libtpu: 0.0.40
codegen_flags: <defaults>
</compile_context>

<pallas_src>
import functools

import jax
import jax.numpy as jnp
from jax import lax
from jax.experimental import pallas as pl
from jax.experimental.pallas import tpu as pltpu


def _round_up(x, m):
    return (x + m - 1) // m * m


def rnn_kernel(x_ref, w_ih0_ref, w_ihl_ref, w_hh_ref, b_ref,
               w_fc_ref, b_fc_ref, out_ref, buf_ref,
               *, num_layers, seq_len, block_b, n_chains):
    """One batch block: all layers, all time steps, plus the final Linear.

    x_ref     : (T*block_b, D)        time-major rows (row = t*block_b + j), f32
    w_ih0_ref : (D, Hp)               layer-0 input->hidden weight (transposed), bf16
    w_ihl_ref : (max(L-1,1), Hp, Hp)  layers 1.. input->hidden weights, bf16
    w_hh_ref  : (L, Hp, Hp)           hidden->hidden weights (transposed), bf16
    b_ref     : (L, 1, Hp)            b_ih + b_hh per layer, f32
    w_fc_ref  : (Hp, Cp)              fc weight (transposed), bf16
    b_fc_ref  : (1, Cp)               fc bias, f32
    out_ref   : (block_b, Cp)         logits for this batch block, f32
    buf_ref   : (T*block_b, Hp)       VMEM staging (proj / layer outputs), f32
    """
    Hp = w_hh_ref.shape[-1]
    sub_b = block_b // n_chains

    h_chains = None
    for l in range(num_layers):                        # static unroll over layers
        # --- 1) One big MXU matmul: input projection (+ bias) for ALL steps.
        if l == 0:
            inp = x_ref[...].astype(jnp.bfloat16)      # (T*block_b, D)
            w_in = w_ih0_ref[...]
        else:
            inp = buf_ref[...].astype(jnp.bfloat16)    # previous layer outputs
            w_in = w_ihl_ref[l - 1]
        proj = jnp.dot(inp, w_in, preferred_element_type=jnp.float32) + b_ref[l]
        buf_ref[...] = proj                            # stage (T*block_b, Hp) f32

        # --- 2) Serial recurrence: h @ W_hh + proj[t] -> tanh per step.
        #        n_chains independent batch sub-chains are interleaved per step
        #        so their MXU/EUP latencies overlap.
        w_rec = w_hh_ref[l]                            # hoisted, loop-invariant
        write_seq = l < num_layers - 1                 # last layer needs only h_T

        def step(t, hs, w_rec=w_rec, write_seq=write_seq):
            row = pl.multiple_of(t * block_b, block_b)
            new_hs = []
            for c in range(n_chains):
                off = pl.multiple_of(row + c * sub_b, sub_b)
                pre = buf_ref[pl.ds(off, sub_b), :] + jnp.dot(
                    hs[c].astype(jnp.bfloat16), w_rec,
                    preferred_element_type=jnp.float32)
                new_hs.append(jnp.tanh(pre))           # f32 carry
            if write_seq:
                for c in range(n_chains):
                    off = pl.multiple_of(row + c * sub_b, sub_b)
                    buf_ref[pl.ds(off, sub_b), :] = new_hs[c]
            return tuple(new_hs)

        init = tuple(jnp.zeros((sub_b, Hp), jnp.float32) for _ in range(n_chains))
        unroll = True if seq_len <= 16 else 8
        h_chains = lax.fori_loop(0, seq_len, step, init, unroll=unroll)

    # --- 3) Final Linear on h_T (lane-dense Cp columns -> unmasked stores).
    w_out = w_fc_ref[...]
    b_out = b_fc_ref[...]
    for c in range(n_chains):
        logits = jnp.dot(h_chains[c].astype(jnp.bfloat16), w_out,
                         preferred_element_type=jnp.float32) + b_out
        out_ref[pl.ds(c * sub_b, sub_b), :] = logits.astype(out_ref.dtype)


def _vmem_budget_bytes():
    # ~48 MiB on 64-MiB chips (v7x per TC), ~96 MiB on 128-MiB chips (v5e/v6e).
    try:
        cap = pltpu.get_tpu_info().vmem_capacity_bytes
    except Exception:
        cap = 64 << 20
    return int(min(cap * 3 // 4, 96 << 20))


def _vmem_estimate_bytes(T, block_b, D, Hp, Cp, num_layers):
    f32, bf16 = 4, 2
    x_blk = T * block_b * D * f32
    buf = T * block_b * Hp * f32
    out = block_b * Cp * f32
    w = (D * Hp + max(num_layers - 1, 1) * Hp * Hp
         + num_layers * Hp * Hp + Hp * Cp) * bf16
    bias = (num_layers * Hp + Cp) * f32
    # Pipelined inputs/outputs are double-buffered by Pallas; scratch is not.
    return 2 * (x_blk + out + w + bias) + buf


def _choose_block_b(B, T, D, Hp, Cp, num_layers, budget):
    B8 = _round_up(B, 8)
    if B8 >= 256:
        bb = 128
    elif B8 >= 16:
        bb = _round_up((B8 + 1) // 2, 8)   # G == 2 -> use both TCs on v7x
    else:
        bb = B8                            # tiny batch: one 8-row block
    while bb > 8 and _vmem_estimate_bytes(T, bb, D, Hp, Cp, num_layers) > budget:
        bb -= 8
    return bb


def rnn_forward(x, params, *, num_layers, block_b=None):
    """x: (B, T, D) batch-first, like the PyTorch module. Returns (B, C) logits."""
    w_ih0, w_ihl, w_hh, b, w_fc, b_fc = params
    B, T, D = x.shape
    H = w_hh.shape[-1]
    C = w_fc.shape[-1]

    # Lane-dense padding of hidden / class dims (pad channels stay exactly 0).
    Hp = _round_up(H, 128)
    Cp = _round_up(C, 128)
    dH, dC = Hp - H, Cp - C
    w_ih0_p = jnp.pad(w_ih0, ((0, 0), (0, dH))).astype(jnp.bfloat16)
    w_ihl_p = jnp.pad(w_ihl, ((0, 0), (0, dH), (0, dH))).astype(jnp.bfloat16)
    w_hh_p = jnp.pad(w_hh, ((0, 0), (0, dH), (0, dH))).astype(jnp.bfloat16)
    b_p = jnp.pad(b, ((0, 0), (0, 0), (0, dH))).astype(jnp.float32)
    w_fc_p = jnp.pad(w_fc, ((0, dH), (0, dC))).astype(jnp.bfloat16)
    b_fc_p = jnp.pad(b_fc, ((0, 0), (0, dC))).astype(jnp.float32)

    budget = _vmem_budget_bytes()
    if block_b is None:
        block_b = _choose_block_b(B, T, D, Hp, Cp, num_layers, budget)
    block_b = max(8, _round_up(block_b, 8))
    B_pad = _round_up(B, block_b)
    G = B_pad // block_b
    n_chains = 2 if (block_b >= 16 and block_b % 16 == 0) else 1

    # (B,T,D) -> pad batch -> (G, block_b, T, D) -> (G, T, block_b, D)
    #   -> (G, T*block_b, D): within a block, row = t*block_b + j.
    x_p = jnp.pad(x.astype(jnp.float32), ((0, B_pad - B), (0, 0), (0, 0)))
    x_g = (x_p.reshape(G, block_b, T, D)
              .transpose(0, 2, 1, 3)
              .reshape(G, T * block_b, D))

    kernel = functools.partial(rnn_kernel, num_layers=num_layers, seq_len=T,
                               block_b=block_b, n_chains=n_chains)

    out = pl.pallas_call(
        kernel,
        grid=(G,),
        out_shape=jax.ShapeDtypeStruct((G, block_b, Cp), jnp.float32),
        in_specs=[
            pl.BlockSpec((None, T * block_b, D), lambda g: (g, 0, 0)),  # x block
            pl.BlockSpec(w_ih0_p.shape, lambda g: (0, 0)),   # grid-invariant
            pl.BlockSpec(w_ihl_p.shape, lambda g: (0, 0, 0)),  # weights stay
            pl.BlockSpec(w_hh_p.shape, lambda g: (0, 0, 0)),   # resident
            pl.BlockSpec(b_p.shape, lambda g: (0, 0, 0)),
            pl.BlockSpec(w_fc_p.shape, lambda g: (0, 0)),
            pl.BlockSpec(b_fc_p.shape, lambda g: (0, 0)),
        ],
        out_specs=pl.BlockSpec((None, block_b, Cp), lambda g: (g, 0, 0)),
        scratch_shapes=[pltpu.VMEM((T * block_b, Hp), jnp.float32)],
        compiler_params=pltpu.CompilerParams(
            dimension_semantics=("parallel",),
            vmem_limit_bytes=budget),
    )(x_g, w_ih0_p, w_ihl_p, w_hh_p, b_p, w_fc_p, b_fc_p)

    return out.reshape(B_pad, Cp)[:B, :C]


def init_params(key, input_size, hidden_size, num_layers, num_classes):
    """Deterministic PyTorch-style uniform(-1/sqrt(H), 1/sqrt(H)) init."""
    k = 1.0 / jnp.sqrt(jnp.float32(hidden_size))
    keys = jax.random.split(key, 4 * num_layers + 2)

    def u(kk, shape):
        return jax.random.uniform(kk, shape, jnp.float32, -k, k)

    # Layer 0: (D_in, H); layers 1..L-1: (H, H)  (already transposed for x @ W)
    w_ih0 = u(keys[0], (input_size, hidden_size))
    w_ihl_list = [u(keys[4 * l + 0], (hidden_size, hidden_size))
                  for l in range(1, num_layers)]
    w_ihl = (jnp.stack(w_ihl_list) if w_ihl_list
             else jnp.zeros((1, hidden_size, hidden_size), jnp.float32))
    w_hh = jnp.stack([u(keys[4 * l + 1], (hidden_size, hidden_size))
                      for l in range(num_layers)])
    b = jnp.stack([(u(keys[4 * l + 2], (1, hidden_size))
                    + u(keys[4 * l + 3], (1, hidden_size)))
                   for l in range(num_layers)])          # b_ih + b_hh
    w_fc = jax.random.uniform(keys[-2], (hidden_size, num_classes),
                              jnp.float32, -k, k)
    b_fc = jax.random.uniform(keys[-1], (1, num_classes),
                              jnp.float32, -k, k)
    return (w_ih0, w_ihl, w_hh, b, w_fc, b_fc)


def rnn_reference(x, params, num_layers):
    """Pure-JAX f32 reference with identical semantics (sanity check)."""
    w_ih0, w_ihl, w_hh, b, w_fc, b_fc = params
    B, T, _ = x.shape
    H = w_hh.shape[-1]
    hs = [jnp.zeros((B, H), jnp.float32) for _ in range(num_layers)]
    for t in range(T):
        inp = x[:, t, :]
        for l in range(num_layers):
            w_in = w_ih0 if l == 0 else w_ihl[l - 1]
            hs[l] = jnp.tanh(inp @ w_in + hs[l] @ w_hh[l] + b[l])
            inp = hs[l]
    return hs[-1] @ w_fc + b_fc


if __name__ == "__main__":
    # Small shapes consistent with the module's forward:
    # x: (batch, seq, input_size); RNN hidden=32, 2 layers; 10 classes.
    batch, seq, input_size = 2, 8, 16
    hidden_size, num_layers, num_classes = 32, 2, 10

    key = jax.random.PRNGKey(0)
    kx, kp = jax.random.split(key)
    params = init_params(kp, input_size, hidden_size, num_layers, num_classes)

    # Case 1: tiny batch (single block, single chain).
    x = jax.random.normal(kx, (batch, seq, input_size), jnp.float32)
    out = jax.block_until_ready(rnn_forward(x, params, num_layers=num_layers))
    ref = rnn_reference(x, params, num_layers)
    assert out.shape == (batch, num_classes)
    # bf16 matmul operands (f32 accumulate) -> relaxed tolerance vs the f32 ref.
    err = jnp.max(jnp.abs(out - ref))
    assert err < 1e-1, f"max abs err (small batch) = {err}"

    # Case 2: larger batch exercising G=2 grid blocks and 2 interleaved chains.
    x2 = jax.random.normal(jax.random.fold_in(kx, 1), (20, seq, input_size),
                           jnp.float32)
    out2 = jax.block_until_ready(rnn_forward(x2, params, num_layers=num_layers))
    ref2 = rnn_reference(x2, params, num_layers)
    assert out2.shape == (20, num_classes)
    err2 = jnp.max(jnp.abs(out2 - ref2))
    assert err2 < 1e-1, f"max abs err (batched) = {err2}"

    print("KERNEL_OK")
</pallas_src>

<mosaic_0001>
module attributes {stable_mosaic.version = 11 : i64} {
  func.func @rnn_kernel(%arg0: i32, %arg1: memref<1x64x16xf32, #tpu.memory_space<vmem>>, %arg2: memref<16x128xbf16, #tpu.memory_space<vmem>>, %arg3: memref<1x128x128xbf16, #tpu.memory_space<vmem>>, %arg4: memref<2x128x128xbf16, #tpu.memory_space<vmem>>, %arg5: memref<2x1x128xf32, #tpu.memory_space<vmem>>, %arg6: memref<128x128xbf16, #tpu.memory_space<vmem>>, %arg7: memref<1x128xf32, #tpu.memory_space<vmem>>, %arg8: memref<1x8x128xf32, #tpu.memory_space<vmem>>, %arg9: memref<64x128xf32, #tpu.memory_space<vmem>>) attributes {dimension_semantics = [#tpu.dimension_semantics<parallel>], iteration_bounds = array<i64: 1>, scalar_prefetch = 0 : i64, scratch_operands = 1 : i64, tpu.core_type = #tpu.core_type<tc>, window_params = [{transform_indices = @transform_0, window_bounds = array<i64: 1, 64, 16>}, {pipeline_mode = #tpu.pipeline_mode<synchronous>, transform_indices = @transform_1, window_bounds = array<i64: 16, 128>}, {pipeline_mode = #tpu.pipeline_mode<synchronous>, transform_indices = @transform_2, window_bounds = array<i64: 1, 128, 128>}, {pipeline_mode = #tpu.pipeline_mode<synchronous>, transform_indices = @transform_3, window_bounds = array<i64: 2, 128, 128>}, {pipeline_mode = #tpu.pipeline_mode<synchronous>, transform_indices = @transform_4, window_bounds = array<i64: 2, 1, 128>}, {pipeline_mode = #tpu.pipeline_mode<synchronous>, transform_indices = @transform_5, window_bounds = array<i64: 128, 128>}, {pipeline_mode = #tpu.pipeline_mode<synchronous>, transform_indices = @transform_6, window_bounds = array<i64: 1, 128>}, {transform_indices = @transform_7, window_bounds = array<i64: 1, 8, 128>}]} {
    %c0 = arith.constant 0 : index
    %c0_0 = arith.constant 0 : index
    %c0_1 = arith.constant 0 : index
    %0 = vector.load %arg1[%c0, %c0_0, %c0_1] : memref<1x64x16xf32, #tpu.memory_space<vmem>>, vector<1x64x16xf32>
    %1 = vector.shape_cast %0 : vector<1x64x16xf32> to vector<64x16xf32>
    %2 = arith.truncf %1 : vector<64x16xf32> to vector<64x16xbf16>
    %c0_2 = arith.constant 0 : index
    %c0_3 = arith.constant 0 : index
    %3 = vector.load %arg2[%c0_2, %c0_3] : memref<16x128xbf16, #tpu.memory_space<vmem>>, vector<16x128xbf16>
    %cst = arith.constant dense<0.000000e+00> : vector<64x128xf32>
    %4 = tpu.matmul %2, %3, %cst {dimension_numbers = #tpu.dot_dimension_numbers<[1], [0], [0], [1], [0, 0, 1, 1], [], []>} : vector<64x16xbf16>, vector<16x128xbf16>, vector<64x128xf32> -> vector<64x128xf32>
    %c0_4 = arith.constant 0 : index
    %c0_5 = arith.constant 0 : index
    %c0_6 = arith.constant 0 : index
    %5 = vector.load %arg5[%c0_4, %c0_5, %c0_6] : memref<2x1x128xf32, #tpu.memory_space<vmem>>, vector<1x1x128xf32>
    %6 = vector.shape_cast %5 : vector<1x1x128xf32> to vector<1x128xf32>
    %7 = vector.broadcast %6 : vector<1x128xf32> to vector<64x128xf32>
    %8 = arith.addf %4, %7 : vector<64x128xf32>
    %c0_7 = arith.constant 0 : index
    %c0_8 = arith.constant 0 : index
    %9 = vector.load %arg9[%c0_7, %c0_8] : memref<64x128xf32, #tpu.memory_space<vmem>>, vector<64x128xf32>
    tpu.vector_store %arg9[%c0_7, %c0_8], %8 {strides = array<i32>} : memref<64x128xf32, #tpu.memory_space<vmem>>, vector<64x128xf32>,
    %c0_9 = arith.constant 0 : index
    %c0_10 = arith.constant 0 : index
    %c0_11 = arith.constant 0 : index
    %10 = vector.load %arg4[%c0_9, %c0_10, %c0_11] : memref<2x128x128xbf16, #tpu.memory_space<vmem>>, vector<1x128x128xbf16>
    %11 = vector.shape_cast %10 : vector<1x128x128xbf16> to vector<128x128xbf16>
    %cst_12 = arith.constant 0.000000e+00 : f32
    %12 = vector.broadcast %cst_12 : f32 to vector<8x128xf32>
    %c0_i32 = arith.constant 0 : i32
    %c8_i32 = arith.constant 8 : i32
    %13 = arith.muli %c0_i32, %c8_i32 : i32
    %14 = tpu.assume_multiple %13, 8 : i32
    %c0_i32_13 = arith.constant 0 : i32
    %15 = arith.addi %14, %c0_i32_13 : i32
    %16 = tpu.assume_multiple %15, 8 : i32
    %17 = arith.index_cast %16 : i32 to index
    %c0_14 = arith.constant 0 : index
    %18 = vector.load %arg9[%17, %c0_14] : memref<64x128xf32, #tpu.memory_space<vmem>>, vector<8x128xf32>
    %19 = arith.truncf %12 : vector<8x128xf32> to vector<8x128xbf16>
    %cst_15 = arith.constant dense<0.000000e+00> : vector<8x128xf32>
    %20 = tpu.matmul %19, %11, %cst_15 {dimension_numbers = #tpu.dot_dimension_numbers<[1], [0], [0], [1], [0, 0, 1, 1], [], []>} : vector<8x128xbf16>, vector<128x128xbf16>, vector<8x128xf32> -> vector<8x128xf32>
    %21 = arith.addf %18, %20 : vector<8x128xf32>
    %22 = math.tanh %21 : vector<8x128xf32>
    %c0_i32_16 = arith.constant 0 : i32
    %23 = arith.addi %14, %c0_i32_16 : i32
    %24 = tpu.assume_multiple %23, 8 : i32
    %25 = arith.index_cast %24 : i32 to index
    %c0_17 = arith.constant 0 : index
    %26 = vector.load %arg9[%25, %c0_17] : memref<64x128xf32, #tpu.memory_space<vmem>>, vector<8x128xf32>
    tpu.vector_store %arg9[%25, %c0_17], %22 {strides = array<i32>} : memref<64x128xf32, #tpu.memory_space<vmem>>, vector<8x128xf32>,
    %c1_i32 = arith.constant 1 : i32
    %c8_i32_18 = arith.constant 8 : i32
    %27 = arith.muli %c1_i32, %c8_i32_18 : i32
    %28 = tpu.assume_multiple %27, 8 : i32
    %c0_i32_19 = arith.constant 0 : i32
    %29 = arith.addi %28, %c0_i32_19 : i32
    %30 = tpu.assume_multiple %29, 8 : i32
    %31 = arith.index_cast %30 : i32 to index
    %c0_20 = arith.constant 0 : index
    %32 = vector.load %arg9[%31, %c0_20] : memref<64x128xf32, #tpu.memory_space<vmem>>, vector<8x128xf32>
    %33 = arith.truncf %22 : vector<8x128xf32> to vector<8x128xbf16>
    %cst_21 = arith.constant dense<0.000000e+00> : vector<8x128xf32>
    %34 = tpu.matmul %33, %11, %cst_21 {dimension_numbers = #tpu.dot_dimension_numbers<[1], [0], [0], [1], [0, 0, 1, 1], [], []>} : vector<8x128xbf16>, vector<128x128xbf16>, vector<8x128xf32> -> vector<8x128xf32>
    %35 = arith.addf %32, %34 : vector<8x128xf32>
    %36 = math.tanh %35 : vector<8x128xf32>
    %c0_i32_22 = arith.constant 0 : i32
    %37 = arith.addi %28, %c0_i32_22 : i32
    %38 = tpu.assume_multiple %37, 8 : i32
    %39 = arith.index_cast %38 : i32 to index
    %c0_23 = arith.constant 0 : index
    %40 = vector.load %arg9[%39, %c0_23] : memref<64x128xf32, #tpu.memory_space<vmem>>, vector<8x128xf32>
    tpu.vector_store %arg9[%39, %c0_23], %36 {strides = array<i32>} : memref<64x128xf32, #tpu.memory_space<vmem>>, vector<8x128xf32>,
    %c2_i32 = arith.constant 2 : i32
    %c8_i32_24 = arith.constant 8 : i32
    %41 = arith.muli %c2_i32, %c8_i32_24 : i32
    %42 = tpu.assume_multiple %41, 8 : i32
    %c0_i32_25 = arith.constant 0 : i32
    %43 = arith.addi %42, %c0_i32_25 : i32
    %44 = tpu.assume_multiple %43, 8 : i32
    %45 = arith.index_cast %44 : i32 to index
    %c0_26 = arith.constant 0 : index
    %46 = vector.load %arg9[%45, %c0_26] : memref<64x128xf32, #tpu.memory_space<vmem>>, vector<8x128xf32>
    %47 = arith.truncf %36 : vector<8x128xf32> to vector<8x128xbf16>
    %cst_27 = arith.constant dense<0.000000e+00> : vector<8x128xf32>
    %48 = tpu.matmul %47, %11, %cst_27 {dimension_numbers = #tpu.dot_dimension_numbers<[1], [0], [0], [1], [0, 0, 1, 1], [], []>} : vector<8x128xbf16>, vector<128x128xbf16>, vector<8x128xf32> -> vector<8x128xf32>
    %49 = arith.addf %46, %48 : vector<8x128xf32>
    %50 = math.tanh %49 : vector<8x128xf32>
    %c0_i32_28 = arith.constant 0 : i32
    %51 = arith.addi %42, %c0_i32_28 : i32
    %52 = tpu.assume_multiple %51, 8 : i32
    %53 = arith.index_cast %52 : i32 to index
    %c0_29 = arith.constant 0 : index
    %54 = vector.load %arg9[%53, %c0_29] : memref<64x128xf32, #tpu.memory_space<vmem>>, vector<8x128xf32>
    tpu.vector_store %arg9[%53, %c0_29], %50 {strides = array<i32>} : memref<64x128xf32, #tpu.memory_space<vmem>>, vector<8x128xf32>,
    %c3_i32 = arith.constant 3 : i32
    %c8_i32_30 = arith.constant 8 : i32
    %55 = arith.muli %c3_i32, %c8_i32_30 : i32
    %56 = tpu.assume_multiple %55, 8 : i32
    %c0_i32_31 = arith.constant 0 : i32
    %57 = arith.addi %56, %c0_i32_31 : i32
    %58 = tpu.assume_multiple %57, 8 : i32
    %59 = arith.index_cast %58 : i32 to index
    %c0_32 = arith.constant 0 : index
    %60 = vector.load %arg9[%59, %c0_32] : memref<64x128xf32, #tpu.memory_space<vmem>>, vector<8x128xf32>
    %61 = arith.truncf %50 : vector<8x128xf32> to vector<8x128xbf16>
    %cst_33 = arith.constant dense<0.000000e+00> : vector<8x128xf32>
    %62 = tpu.matmul %61, %11, %cst_33 {dimension_numbers = #tpu.dot_dimension_numbers<[1], [0], [0], [1], [0, 0, 1, 1], [], []>} : vector<8x128xbf16>, vector<128x128xbf16>, vector<8x128xf32> -> vector<8x128xf32>
    %63 = arith.addf %60, %62 : vector<8x128xf32>
    %64 = math.tanh %63 : vector<8x128xf32>
    %c0_i32_34 = arith.constant 0 : i32
    %65 = arith.addi %56, %c0_i32_34 : i32
    %66 = tpu.assume_multiple %65, 8 : i32
    %67 = arith.index_cast %66 : i32 to index
    %c0_35 = arith.constant 0 : index
    %68 = vector.load %arg9[%67, %c0_35] : memref<64x128xf32, #tpu.memory_space<vmem>>, vector<8x128xf32>
    tpu.vector_store %arg9[%67, %c0_35], %64 {strides = array<i32>} : memref<64x128xf32, #tpu.memory_space<vmem>>, vector<8x128xf32>,
    %c4_i32 = arith.constant 4 : i32
    %c8_i32_36 = arith.constant 8 : i32
    %69 = arith.muli %c4_i32, %c8_i32_36 : i32
    %70 = tpu.assume_multiple %69, 8 : i32
    %c0_i32_37 = arith.constant 0 : i32
    %71 = arith.addi %70, %c0_i32_37 : i32
    %72 = tpu.assume_multiple %71, 8 : i32
    %73 = arith.index_cast %72 : i32 to index
    %c0_38 = arith.constant 0 : index
    %74 = vector.load %arg9[%73, %c0_38] : memref<64x128xf32, #tpu.memory_space<vmem>>, vector<8x128xf32>
    %75 = arith.truncf %64 : vector<8x128xf32> to vector<8x128xbf16>
    %cst_39 = arith.constant dense<0.000000e+00> : vector<8x128xf32>
    %76 = tpu.matmul %75, %11, %cst_39 {dimension_numbers = #tpu.dot_dimension_numbers<[1], [0], [0], [1], [0, 0, 1, 1], [], []>} : vector<8x128xbf16>, vector<128x128xbf16>, vector<8x128xf32> -> vector<8x128xf32>
    %77 = arith.addf %74, %76 : vector<8x128xf32>
    %78 = math.tanh %77 : vector<8x128xf32>
    %c0_i32_40 = arith.constant 0 : i32
    %79 = arith.addi %70, %c0_i32_40 : i32
    %80 = tpu.assume_multiple %79, 8 : i32
    %81 = arith.index_cast %80 : i32 to index
    %c0_41 = arith.constant 0 : index
    %82 = vector.load %arg9[%81, %c0_41] : memref<64x128xf32, #tpu.memory_space<vmem>>, vector<8x128xf32>
    tpu.vector_store %arg9[%81, %c0_41], %78 {strides = array<i32>} : memref<64x128xf32, #tpu.memory_space<vmem>>, vector<8x128xf32>,
    %c5_i32 = arith.constant 5 : i32
    %c8_i32_42 = arith.constant 8 : i32
    %83 = arith.muli %c5_i32, %c8_i32_42 : i32
    %84 = tpu.assume_multiple %83, 8 : i32
    %c0_i32_43 = arith.constant 0 : i32
    %85 = arith.addi %84, %c0_i32_43 : i32
    %86 = tpu.assume_multiple %85, 8 : i32
    %87 = arith.index_cast %86 : i32 to index
    %c0_44 = arith.constant 0 : index
    %88 = vector.load %arg9[%87, %c0_44] : memref<64x128xf32, #tpu.memory_space<vmem>>, vector<8x128xf32>
    %89 = arith.truncf %78 : vector<8x128xf32> to vector<8x128xbf16>
    %cst_45 = arith.constant dense<0.000000e+00> : vector<8x128xf32>
    %90 = tpu.matmul %89, %11, %cst_45 {dimension_numbers = #tpu.dot_dimension_numbers<[1], [0], [0], [1], [0, 0, 1, 1], [], []>} : vector<8x128xbf16>, vector<128x128xbf16>, vector<8x128xf32> -> vector<8x128xf32>
    %91 = arith.addf %88, %90 : vector<8x128xf32>
    %92 = math.tanh %91 : vector<8x128xf32>
    %c0_i32_46 = arith.constant 0 : i32
    %93 = arith.addi %84, %c0_i32_46 : i32
    %94 = tpu.assume_multiple %93, 8 : i32
    %95 = arith.index_cast %94 : i32 to index
    %c0_47 = arith.constant 0 : index
    %96 = vector.load %arg9[%95, %c0_47] : memref<64x128xf32, #tpu.memory_space<vmem>>, vector<8x128xf32>
    tpu.vector_store %arg9[%95, %c0_47], %92 {strides = array<i32>} : memref<64x128xf32, #tpu.memory_space<vmem>>, vector<8x128xf32>,
    %c6_i32 = arith.constant 6 : i32
    %c8_i32_48 = arith.constant 8 : i32
    %97 = arith.muli %c6_i32, %c8_i32_48 : i32
    %98 = tpu.assume_multiple %97, 8 : i32
    %c0_i32_49 = arith.constant 0 : i32
    %99 = arith.addi %98, %c0_i32_49 : i32
    %100 = tpu.assume_multiple %99, 8 : i32
    %101 = arith.index_cast %100 : i32 to index
    %c0_50 = arith.constant 0 : index
    %102 = vector.load %arg9[%101, %c0_50] : memref<64x128xf32, #tpu.memory_space<vmem>>, vector<8x128xf32>
    %103 = arith.truncf %92 : vector<8x128xf32> to vector<8x128xbf16>
    %cst_51 = arith.constant dense<0.000000e+00> : vector<8x128xf32>
    %104 = tpu.matmul %103, %11, %cst_51 {dimension_numbers = #tpu.dot_dimension_numbers<[1], [0], [0], [1], [0, 0, 1, 1], [], []>} : vector<8x128xbf16>, vector<128x128xbf16>, vector<8x128xf32> -> vector<8x128xf32>
    %105 = arith.addf %102, %104 : vector<8x128xf32>
    %106 = math.tanh %105 : vector<8x128xf32>
    %c0_i32_52 = arith.constant 0 : i32
    %107 = arith.addi %98, %c0_i32_52 : i32
    %108 = tpu.assume_multiple %107, 8 : i32
    %109 = arith.index_cast %108 : i32 to index
    %c0_53 = arith.constant 0 : index
    %110 = vector.load %arg9[%109, %c0_53] : memref<64x128xf32, #tpu.memory_space<vmem>>, vector<8x128xf32>
    tpu.vector_store %arg9[%109, %c0_53], %106 {strides = array<i32>} : memref<64x128xf32, #tpu.memory_space<vmem>>, vector<8x128xf32>,
    %c7_i32 = arith.constant 7 : i32
    %c8_i32_54 = arith.constant 8 : i32
    %111 = arith.muli %c7_i32, %c8_i32_54 : i32
    %112 = tpu.assume_multiple %111, 8 : i32
    %c0_i32_55 = arith.constant 0 : i32
    %113 = arith.addi %112, %c0_i32_55 : i32
    %114 = tpu.assume_multiple %113, 8 : i32
    %115 = arith.index_cast %114 : i32 to index
    %c0_56 = arith.constant 0 : index
    %116 = vector.load %arg9[%115, %c0_56] : memref<64x128xf32, #tpu.memory_space<vmem>>, vector<8x128xf32>
    %117 = arith.truncf %106 : vector<8x128xf32> to vector<8x128xbf16>
    %cst_57 = arith.constant dense<0.000000e+00> : vector<8x128xf32>
    %118 = tpu.matmul %117, %11, %cst_57 {dimension_numbers = #tpu.dot_dimension_numbers<[1], [0], [0], [1], [0, 0, 1, 1], [], []>} : vector<8x128xbf16>, vector<128x128xbf16>, vector<8x128xf32> -> vector<8x128xf32>
    %119 = arith.addf %116, %118 : vector<8x128xf32>
    %120 = math.tanh %119 : vector<8x128xf32>
    %c0_i32_58 = arith.constant 0 : i32
    %121 = arith.addi %112, %c0_i32_58 : i32
    %122 = tpu.assume_multiple %121, 8 : i32
    %123 = arith.index_cast %122 : i32 to index
    %c0_59 = arith.constant 0 : index
    %124 = vector.load %arg9[%123, %c0_59] : memref<64x128xf32, #tpu.memory_space<vmem>>, vector<8x128xf32>
    tpu.vector_store %arg9[%123, %c0_59], %120 {strides = array<i32>} : memref<64x128xf32, #tpu.memory_space<vmem>>, vector<8x128xf32>,
    %c8_i32_60 = arith.constant 8 : i32
    %c0_61 = arith.constant 0 : index
    %c0_62 = arith.constant 0 : index
    %125 = vector.load %arg9[%c0_61, %c0_62] : memref<64x128xf32, #tpu.memory_space<vmem>>, vector<64x128xf32>
    %126 = arith.truncf %125 : vector<64x128xf32> to vector<64x128xbf16>
    %c0_63 = arith.constant 0 : index
    %c0_64 = arith.constant 0 : index
    %c0_65 = arith.constant 0 : index
    %127 = vector.load %arg3[%c0_63, %c0_64, %c0_65] : memref<1x128x128xbf16, #tpu.memory_space<vmem>>, vector<1x128x128xbf16>
    %128 = vector.shape_cast %127 : vector<1x128x128xbf16> to vector<128x128xbf16>
    %cst_66 = arith.constant dense<0.000000e+00> : vector<64x128xf32>
    %129 = tpu.matmul %126, %128, %cst_66 {dimension_numbers = #tpu.dot_dimension_numbers<[1], [0], [0], [1], [0, 0, 1, 1], [], []>} : vector<64x128xbf16>, vector<128x128xbf16>, vector<64x128xf32> -> vector<64x128xf32>
    %c1 = arith.constant 1 : index
    %c0_67 = arith.constant 0 : index
    %c0_68 = arith.constant 0 : index
    %130 = vector.load %arg5[%c1, %c0_67, %c0_68] : memref<2x1x128xf32, #tpu.memory_space<vmem>>, vector<1x1x128xf32>
    %131 = vector.shape_cast %130 : vector<1x1x128xf32> to vector<1x128xf32>
    %132 = vector.broadcast %131 : vector<1x128xf32> to vector<64x128xf32>
    %133 = arith.addf %129, %132 : vector<64x128xf32>
    %c0_69 = arith.constant 0 : index
    %c0_70 = arith.constant 0 : index
    %134 = vector.load %arg9[%c0_69, %c0_70] : memref<64x128xf32, #tpu.memory_space<vmem>>, vector<64x128xf32>
    tpu.vector_store %arg9[%c0_69, %c0_70], %133 {strides = array<i32>} : memref<64x128xf32, #tpu.memory_space<vmem>>, vector<64x128xf32>,
    %c1_71 = arith.constant 1 : index
    %c0_72 = arith.constant 0 : index
    %c0_73 = arith.constant 0 : index
    %135 = vector.load %arg4[%c1_71, %c0_72, %c0_73] : memref<2x128x128xbf16, #tpu.memory_space<vmem>>, vector<1x128x128xbf16>
    %136 = vector.shape_cast %135 : vector<1x128x128xbf16> to vector<128x128xbf16>
    %cst_74 = arith.constant 0.000000e+00 : f32
    %137 = vector.broadcast %cst_74 : f32 to vector<8x128xf32>
    %c0_i32_75 = arith.constant 0 : i32
    %c8_i32_76 = arith.constant 8 : i32
    %138 = arith.muli %c0_i32_75, %c8_i32_76 : i32
    %139 = tpu.assume_multiple %138, 8 : i32
    %c0_i32_77 = arith.constant 0 : i32
    %140 = arith.addi %139, %c0_i32_77 : i32
    %141 = tpu.assume_multiple %140, 8 : i32
    %142 = arith.index_cast %141 : i32 to index
    %c0_78 = arith.constant 0 : index
    %143 = vector.load %arg9[%142, %c0_78] : memref<64x128xf32, #tpu.memory_space<vmem>>, vector<8x128xf32>
    %144 = arith.truncf %137 : vector<8x128xf32> to vector<8x128xbf16>
    %cst_79 = arith.constant dense<0.000000e+00> : vector<8x128xf32>
    %145 = tpu.matmul %144, %136, %cst_79 {dimension_numbers = #tpu.dot_dimension_numbers<[1], [0], [0], [1], [0, 0, 1, 1], [], []>} : vector<8x128xbf16>, vector<128x128xbf16>, vector<8x128xf32> -> vector<8x128xf32>
    %146 = arith.addf %143, %145 : vector<8x128xf32>
    %147 = math.tanh %146 : vector<8x128xf32>
    %c1_i32_80 = arith.constant 1 : i32
    %c8_i32_81 = arith.constant 8 : i32
    %148 = arith.muli %c1_i32_80, %c8_i32_81 : i32
    %149 = tpu.assume_multiple %148, 8 : i32
    %c0_i32_82 = arith.constant 0 : i32
    %150 = arith.addi %149, %c0_i32_82 : i32
    %151 = tpu.assume_multiple %150, 8 : i32
    %152 = arith.index_cast %151 : i32 to index
    %c0_83 = arith.constant 0 : index
    %153 = vector.load %arg9[%152, %c0_83] : memref<64x128xf32, #tpu.memory_space<vmem>>, vector<8x128xf32>
    %154 = arith.truncf %147 : vector<8x128xf32> to vector<8x128xbf16>
    %cst_84 = arith.constant dense<0.000000e+00> : vector<8x128xf32>
    %155 = tpu.matmul %154, %136, %cst_84 {dimension_numbers = #tpu.dot_dimension_numbers<[1], [0], [0], [1], [0, 0, 1, 1], [], []>} : vector<8x128xbf16>, vector<128x128xbf16>, vector<8x128xf32> -> vector<8x128xf32>
    %156 = arith.addf %153, %155 : vector<8x128xf32>
    %157 = math.tanh %156 : vector<8x128xf32>
    %c2_i32_85 = arith.constant 2 : i32
    %c8_i32_86 = arith.constant 8 : i32
    %158 = arith.muli %c2_i32_85, %c8_i32_86 : i32
    %159 = tpu.assume_multiple %158, 8 : i32
    %c0_i32_87 = arith.constant 0 : i32
    %160 = arith.addi %159, %c0_i32_87 : i32
    %161 = tpu.assume_multiple %160, 8 : i32
    %162 = arith.index_cast %161 : i32 to index
    %c0_88 = arith.constant 0 : index
    %163 = vector.load %arg9[%162, %c0_88] : memref<64x128xf32, #tpu.memory_space<vmem>>, vector<8x128xf32>
    %164 = arith.truncf %157 : vector<8x128xf32> to vector<8x128xbf16>
    %cst_89 = arith.constant dense<0.000000e+00> : vector<8x128xf32>
    %165 = tpu.matmul %164, %136, %cst_89 {dimension_numbers = #tpu.dot_dimension_numbers<[1], [0], [0], [1], [0, 0, 1, 1], [], []>} : vector<8x128xbf16>, vector<128x128xbf16>, vector<8x128xf32> -> vector<8x128xf32>
    %166 = arith.addf %163, %165 : vector<8x128xf32>
    %167 = math.tanh %166 : vector<8x128xf32>
    %c3_i32_90 = arith.constant 3 : i32
    %c8_i32_91 = arith.constant 8 : i32
    %168 = arith.muli %c3_i32_90, %c8_i32_91 : i32
    %169 = tpu.assume_multiple %168, 8 : i32
    %c0_i32_92 = arith.constant 0 : i32
    %170 = arith.addi %169, %c0_i32_92 : i32
    %171 = tpu.assume_multiple %170, 8 : i32
    %172 = arith.index_cast %171 : i32 to index
    %c0_93 = arith.constant 0 : index
    %173 = vector.load %arg9[%172, %c0_93] : memref<64x128xf32, #tpu.memory_space<vmem>>, vector<8x128xf32>
    %174 = arith.truncf %167 : vector<8x128xf32> to vector<8x128xbf16>
    %cst_94 = arith.constant dense<0.000000e+00> : vector<8x128xf32>
    %175 = tpu.matmul %174, %136, %cst_94 {dimension_numbers = #tpu.dot_dimension_numbers<[1], [0], [0], [1], [0, 0, 1, 1], [], []>} : vector<8x128xbf16>, vector<128x128xbf16>, vector<8x128xf32> -> vector<8x128xf32>
    %176 = arith.addf %173, %175 : vector<8x128xf32>
    %177 = math.tanh %176 : vector<8x128xf32>
    %c4_i32_95 = arith.constant 4 : i32
    %c8_i32_96 = arith.constant 8 : i32
    %178 = arith.muli %c4_i32_95, %c8_i32_96 : i32
    %179 = tpu.assume_multiple %178, 8 : i32
    %c0_i32_97 = arith.constant 0 : i32
    %180 = arith.addi %179, %c0_i32_97 : i32
    %181 = tpu.assume_multiple %180, 8 : i32
    %182 = arith.index_cast %181 : i32 to index
    %c0_98 = arith.constant 0 : index
    %183 = vector.load %arg9[%182, %c0_98] : memref<64x128xf32, #tpu.memory_space<vmem>>, vector<8x128xf32>
    %184 = arith.truncf %177 : vector<8x128xf32> to vector<8x128xbf16>
    %cst_99 = arith.constant dense<0.000000e+00> : vector<8x128xf32>
    %185 = tpu.matmul %184, %136, %cst_99 {dimension_numbers = #tpu.dot_dimension_numbers<[1], [0], [0], [1], [0, 0, 1, 1], [], []>} : vector<8x128xbf16>, vector<128x128xbf16>, vector<8x128xf32> -> vector<8x128xf32>
    %186 = arith.addf %183, %185 : vector<8x128xf32>
    %187 = math.tanh %186 : vector<8x128xf32>
    %c5_i32_100 = arith.constant 5 : i32
    %c8_i32_101 = arith.constant 8 : i32
    %188 = arith.muli %c5_i32_100, %c8_i32_101 : i32
    %189 = tpu.assume_multiple %188, 8 : i32
    %c0_i32_102 = arith.constant 0 : i32
    %190 = arith.addi %189, %c0_i32_102 : i32
    %191 = tpu.assume_multiple %190, 8 : i32
    %192 = arith.index_cast %191 : i32 to index
    %c0_103 = arith.constant 0 : index
    %193 = vector.load %arg9[%192, %c0_103] : memref<64x128xf32, #tpu.memory_space<vmem>>, vector<8x128xf32>
    %194 = arith.truncf %187 : vector<8x128xf32> to vector<8x128xbf16>
    %cst_104 = arith.constant dense<0.000000e+00> : vector<8x128xf32>
    %195 = tpu.matmul %194, %136, %cst_104 {dimension_numbers = #tpu.dot_dimension_numbers<[1], [0], [0], [1], [0, 0, 1, 1], [], []>} : vector<8x128xbf16>, vector<128x128xbf16>, vector<8x128xf32> -> vector<8x128xf32>
    %196 = arith.addf %193, %195 : vector<8x128xf32>
    %197 = math.tanh %196 : vector<8x128xf32>
    %c6_i32_105 = arith.constant 6 : i32
    %c8_i32_106 = arith.constant 8 : i32
    %198 = arith.muli %c6_i32_105, %c8_i32_106 : i32
    %199 = tpu.assume_multiple %198, 8 : i32
    %c0_i32_107 = arith.constant 0 : i32
    %200 = arith.addi %199, %c0_i32_107 : i32
    %201 = tpu.assume_multiple %200, 8 : i32
    %202 = arith.index_cast %201 : i32 to index
    %c0_108 = arith.constant 0 : index
    %203 = vector.load %arg9[%202, %c0_108] : memref<64x128xf32, #tpu.memory_space<vmem>>, vector<8x128xf32>
    %204 = arith.truncf %197 : vector<8x128xf32> to vector<8x128xbf16>
    %cst_109 = arith.constant dense<0.000000e+00> : vector<8x128xf32>
    %205 = tpu.matmul %204, %136, %cst_109 {dimension_numbers = #tpu.dot_dimension_numbers<[1], [0], [0], [1], [0, 0, 1, 1], [], []>} : vector<8x128xbf16>, vector<128x128xbf16>, vector<8x128xf32> -> vector<8x128xf32>
    %206 = arith.addf %203, %205 : vector<8x128xf32>
    %207 = math.tanh %206 : vector<8x128xf32>
    %c7_i32_110 = arith.constant 7 : i32
    %c8_i32_111 = arith.constant 8 : i32
    %208 = arith.muli %c7_i32_110, %c8_i32_111 : i32
    %209 = tpu.assume_multiple %208, 8 : i32
    %c0_i32_112 = arith.constant 0 : i32
    %210 = arith.addi %209, %c0_i32_112 : i32
    %211 = tpu.assume_multiple %210, 8 : i32
    %212 = arith.index_cast %211 : i32 to index
    %c0_113 = arith.constant 0 : index
    %213 = vector.load %arg9[%212, %c0_113] : memref<64x128xf32, #tpu.memory_space<vmem>>, vector<8x128xf32>
    %214 = arith.truncf %207 : vector<8x128xf32> to vector<8x128xbf16>
    %cst_114 = arith.constant dense<0.000000e+00> : vector<8x128xf32>
    %215 = tpu.matmul %214, %136, %cst_114 {dimension_numbers = #tpu.dot_dimension_numbers<[1], [0], [0], [1], [0, 0, 1, 1], [], []>} : vector<8x128xbf16>, vector<128x128xbf16>, vector<8x128xf32> -> vector<8x128xf32>
    %216 = arith.addf %213, %215 : vector<8x128xf32>
    %217 = math.tanh %216 : vector<8x128xf32>
    %c8_i32_115 = arith.constant 8 : i32
    %c0_116 = arith.constant 0 : index
    %c0_117 = arith.constant 0 : index
    %218 = vector.load %arg6[%c0_116, %c0_117] : memref<128x128xbf16, #tpu.memory_space<vmem>>, vector<128x128xbf16>
    %c0_118 = arith.constant 0 : index
    %c0_119 = arith.constant 0 : index
    %219 = vector.load %arg7[%c0_118, %c0_119] : memref<1x128xf32, #tpu.memory_space<vmem>>, vector<1x128xf32>
    %220 = arith.truncf %217 : vector<8x128xf32> to vector<8x128xbf16>
    %cst_120 = arith.constant dense<0.000000e+00> : vector<8x128xf32>
    %221 = tpu.matmul %220, %218, %cst_120 {dimension_numbers = #tpu.dot_dimension_numbers<[1], [0], [0], [1], [0, 0, 1, 1], [], []>} : vector<8x128xbf16>, vector<128x128xbf16>, vector<8x128xf32> -> vector<8x128xf32>
    %222 = vector.broadcast %219 : vector<1x128xf32> to vector<8x128xf32>
    %223 = arith.addf %221, %222 : vector<8x128xf32>
    %c0_121 = arith.constant 0 : index
    %c0_122 = arith.constant 0 : index
    %c0_123 = arith.constant 0 : index
    %224 = vector.load %arg8[%c0_121, %c0_122, %c0_123] : memref<1x8x128xf32, #tpu.memory_space<vmem>>, vector<1x8x128xf32>
    %225 = vector.shape_cast %224 : vector<1x8x128xf32> to vector<8x128xf32>
    %226 = vector.shape_cast %223 : vector<8x128xf32> to vector<1x8x128xf32>
    tpu.vector_store %arg8[%c0_121, %c0_122, %c0_123], %226 {strides = array<i32>} : memref<1x8x128xf32, #tpu.memory_space<vmem>>, vector<1x8x128xf32>,
    return
  }
  func.func @transform_0(%arg0: i32) -> (i32, i32, i32) {
    %c0_i32 = arith.constant 0 : i32
    %c0_i32_0 = arith.constant 0 : i32
    %c0_i32_1 = arith.constant 0 : i32
    return %arg0, %c0_i32, %c0_i32_0 : i32, i32, i32
  }
  func.func @transform_1(%arg0: i32) -> (i32, i32) {
    %c0_i32 = arith.constant 0 : i32
    %c0_i32_0 = arith.constant 0 : i32
    %c0_i32_1 = arith.constant 0 : i32
    return %c0_i32, %c0_i32_0 : i32, i32
  }
  func.func @transform_2(%arg0: i32) -> (i32, i32, i32) {
    %c0_i32 = arith.constant 0 : i32
    %c0_i32_0 = arith.constant 0 : i32
    %c0_i32_1 = arith.constant 0 : i32
    %c0_i32_2 = arith.constant 0 : i32
    return %c0_i32, %c0_i32_0, %c0_i32_1 : i32, i32, i32
  }
  func.func @transform_3(%arg0: i32) -> (i32, i32, i32) {
    %c0_i32 = arith.constant 0 : i32
    %c0_i32_0 = arith.constant 0 : i32
    %c0_i32_1 = arith.constant 0 : i32
    %c0_i32_2 = arith.constant 0 : i32
    return %c0_i32, %c0_i32_0, %c0_i32_1 : i32, i32, i32
  }
  func.func @transform_4(%arg0: i32) -> (i32, i32, i32) {
    %c0_i32 = arith.constant 0 : i32
    %c0_i32_0 = arith.constant 0 : i32
    %c0_i32_1 = arith.constant 0 : i32
    %c0_i32_2 = arith.constant 0 : i32
    return %c0_i32, %c0_i32_0, %c0_i32_1 : i32, i32, i32
  }
  func.func @transform_5(%arg0: i32) -> (i32, i32) {
    %c0_i32 = arith.constant 0 : i32
    %c0_i32_0 = arith.constant 0 : i32
    %c0_i32_1 = arith.constant 0 : i32
    return %c0_i32, %c0_i32_0 : i32, i32
  }
  func.func @transform_6(%arg0: i32) -> (i32, i32) {
    %c0_i32 = arith.constant 0 : i32
    %c0_i32_0 = arith.constant 0 : i32
    %c0_i32_1 = arith.constant 0 : i32
    return %c0_i32, %c0_i32_0 : i32, i32
  }
  func.func @transform_7(%arg0: i32) -> (i32, i32, i32) {
    %c0_i32 = arith.constant 0 : i32
    %c0_i32_0 = arith.constant 0 : i32
    %c0_i32_1 = arith.constant 0 : i32
    return %arg0, %c0_i32, %c0_i32_0 : i32, i32, i32
  }
}

</mosaic_0001>

<llo_original>
// kernel: tpu_custom_call.1
$region0: #{tpu_custom_call.1}
  #allocation0 [shape = 'u32[]', space=smem, size = 0x4, offset = 0x4, fixed_abs, tag = 'smem constant byte address 0x4 - core index']
  #allocation1 [shape = 'u32[144,128]{1,0:T(1,128)}', space=vmem, size = 0x12000, scoped, tag = 'internal scratch']
  #allocation2 [shape = 'f32[64,128]{1,0:T(8,128)}', space=vmem, size = 0x8000, scoped, tag = 'scratch operand']
  %s0 = inlined_call_operand.vmem [shape: f32[1,64,16], index: 0, kind: input, shape index: {}]
  %s1 = inlined_call_operand.vmem [shape: bf16[16,128], index: 1, kind: input, shape index: {}]
  %s2 = inlined_call_operand.vmem [shape: bf16[1,128,128], index: 2, kind: input, shape index: {}]
  %s3 = inlined_call_operand.hbm [shape: bf16[2,128,128], index: 3, kind: input, shape index: {}]
  %s4 = inlined_call_operand.vmem [shape: f32[2,1,128], index: 4, kind: input, shape index: {}]
  %s5 = inlined_call_operand.hbm [shape: bf16[128,128], index: 5, kind: input, shape index: {}]
  %s6 = inlined_call_operand.vmem [shape: f32[1,128], index: 6, kind: input, shape index: {}]
  %s7 = inlined_call_operand.hbm [shape: f32[1,8,128], index: 7, kind: output, shape index: {}]
  %s8 = sld [smem:[#allocation0]]
  $region46: #{tpu_custom_call.1} parent=0
    _
  %s10 = ssub.s32 1, %s8
  %s11 = scalar_select 0, %s10, %s8
  $region1: #{tpu_custom_call.1} parent=0
    #allocation3 [shape = 'u8[65536]{0}', space=vmem, size = 0x10000, scoped, tag = 'input window, operand 3, single buffered']
    #allocation4 [shape = 's32[1]{0}', space=sflag, size = 0x4, scoped, tag = 'scoped memory for tpu_custom_call.1']
    #allocation5 [shape = 's32[1]{0}', space=sflag, size = 0x4, scoped, tag = 'scoped memory for tpu_custom_call.1']
    #allocation6 [shape = 'u8[32768]{0}', space=vmem, size = 0x8000, scoped, tag = 'input window, operand 5, single buffered']
    #allocation7 [shape = 's32[1]{0}', space=sflag, size = 0x4, scoped, tag = 'scoped memory for tpu_custom_call.1']
    #allocation8 [shape = 'u8[4096]{0}', space=vmem, size = 0x1000, scoped, tag = 'output window, operand 0, single buffered']
    %12 = vsyncpa [#allocation4], 0
    %13 = vsyncpa [#allocation7], 0
    %14 = vsyncpa [#allocation5], 0
    // Predicated region
    $region2: #{tpu_custom_call.1} parent=1 // pred_check
      _
    $region3: #{tpu_custom_call.1} parent=1 // pred_check_branch
      %16 = sbr.rel (0) target = $region5
    $region4: #{tpu_custom_call.1} parent=1 // pred_region
      _
    $region5: #{tpu_custom_call.1} parent=1 // pred_fallthru
      _
    // Predicated region
    $region6: #{tpu_custom_call.1} parent=1 // pred_check
      _
    $region7: #{tpu_custom_call.1} parent=1 // pred_check_branch
      %18 = sbr.rel (0) target = $region9
    $region8: #{tpu_custom_call.1} parent=1 // pred_region
      _
    $region9: #{tpu_custom_call.1} parent=1 // pred_fallthru
      _
    // Predicated region
    $region10: #{tpu_custom_call.1} parent=1 // pred_check
      _
    $region11: #{tpu_custom_call.1} parent=1 // pred_check_branch
      %20 = sbr.rel (0) target = $region13
    $region12: #{tpu_custom_call.1} parent=1 // pred_region
      _
    $region13: #{tpu_custom_call.1} parent=1 // pred_fallthru
      _
    // Predicated region
    $region14: #{tpu_custom_call.1} parent=1 // pred_check
      _
    $region15: #{tpu_custom_call.1} parent=1 // pred_check_branch
      %22 = sbr.rel (0) target = $region17
    $region16: #{tpu_custom_call.1} parent=1 // pred_region
      %s24 = ssub.s32 2048, 2048
      %25 = vsyncadd [#allocation4], %s24
      %s26 = sshll.u32 [#allocation3], 4
      %s27 = int_to_ptr.vmem [resolvable:$true] %s26
      %32 = dma.hbm_to_vmem [thread:$0]  %s3, 2048, %s27, [#allocation4], 64, 64, 4
    $region17: #{tpu_custom_call.1} parent=1 // pred_fallthru
      _
    // Predicated region
    $region18: #{tpu_custom_call.1} parent=1 // pred_check
      _
    $region19: #{tpu_custom_call.1} parent=1 // pred_check_branch
      %34 = sbr.rel (0) target = $region21
    $region20: #{tpu_custom_call.1} parent=1 // pred_region
      _
    $region21: #{tpu_custom_call.1} parent=1 // pred_fallthru
      _
    // Predicated region
    $region22: #{tpu_custom_call.1} parent=1 // pred_check
      _
    $region23: #{tpu_custom_call.1} parent=1 // pred_check_branch
      %36 = sbr.rel (0) target = $region25
    $region24: #{tpu_custom_call.1} parent=1 // pred_region
      %s38 = ssub.s32 1024, 1024
      %39 = vsyncadd [#allocation7], %s38
      %s40 = sshll.u32 [#allocation6], 4
      %s41 = int_to_ptr.vmem [resolvable:$true] %s40
      %46 = dma.hbm_to_vmem [thread:$0]  %s5, 1024, %s41, [#allocation7], 64, 64, 4
    $region25: #{tpu_custom_call.1} parent=1 // pred_fallthru
      _
    // Predicated region
    $region26: #{tpu_custom_call.1} parent=1 // pred_check
      _
    $region27: #{tpu_custom_call.1} parent=1 // pred_check_branch
      %48 = sbr.rel (0) target = $region29
    $region28: #{tpu_custom_call.1} parent=1 // pred_region
      _
    $region29: #{tpu_custom_call.1} parent=1 // pred_fallthru
      _
    // Predicated region
    $region30: #{tpu_custom_call.1} parent=1 // pred_check
      _
    $region31: #{tpu_custom_call.1} parent=1 // pred_check_branch
      %50 = sbr.rel (0) target = $region33
    $region32: #{tpu_custom_call.1} parent=1 // pred_region
      %51 = dma.done [#allocation4], 2048
    $region33: #{tpu_custom_call.1} parent=1 // pred_fallthru
      _
    // Predicated region
    $region34: #{tpu_custom_call.1} parent=1 // pred_check
      _
    $region35: #{tpu_custom_call.1} parent=1 // pred_check_branch
      %53 = sbr.rel (0) target = $region37
    $region36: #{tpu_custom_call.1} parent=1 // pred_region
      %54 = dma.done [#allocation7], 1024
    $region37: #{tpu_custom_call.1} parent=1 // pred_fallthru
      _
    %v56 = vld [vmem:[%s0] sm:$0xff]
    %v57 = vld [vmem:[%s0 + $0x8] sm:$0xff]
    %v58 = vld [vmem:[%s0 + $0x10] sm:$0xff]
    %v59 = vld [vmem:[%s0 + $0x18] sm:$0xff]
    %v60 = vld [vmem:[%s0 + $0x20] sm:$0xff]
    %v61 = vld [vmem:[%s0 + $0x28] sm:$0xff]
    %v62 = vld [vmem:[%s0 + $0x30] sm:$0xff]
    %v63 = vld [vmem:[%s0 + $0x38] sm:$0xff]
    %v64 = vpack.c.bf16 %v57, %v56
    %v65 = vpack.c.bf16 %v59, %v58
    %v66 = vpack.c.bf16 %v61, %v60
    %v67 = vpack.c.bf16 %v63, %v62
    %v68 = vld [vmem:[%s1] sm:$0xf]
    %v69 = vld [vmem:[%s1 + $0x4] sm:$0xf]
    %v70 = vld [vmem:[%s4] sm:$0x1]
    %v72 = vlaneseq
    %v73 = vshrl.u32 %v72, 7
    %v74 = vsub.s32 0, %v73
    %v75 = vrot.slane %v70, %v74
    %v79 = vunpack.c.l.b16 %v68
    %v80 = vunpack.c.l.b16 %v69
    %v81 = vpack.c.b16 %v80, %v79
    %vm83 = vcmask 130048
    %v85 = vsel %vm83, %v64, 0
    %v88 = vsel %vm83, %v65, 0
    %v91 = vsel %vm83, %v66, 0
    %v94 = vsel %vm83, %v67, 0
    %96 = vmatprep.subr.bf16.mxu0 0
    %97 = vmatpush1.bf16.msra.mxu0 %v81
    %98 = vmatprep.subr.bf16.mxu0 0
    %99 = vmatpush1.bf16.msra.mxu0 0
    %100 = vmatprep.subr.bf16.mxu0 0
    %101 = vmatpush1.bf16.msra.mxu0 0
    %102 = vmatprep.subr.bf16.mxu0 0
    %103 = vmatpush1.bf16.msra.mxu0 0
    %104 = vmatprep.subr.bf16.mxu0 0
    %105 = vmatpush1.bf16.msra.mxu0 0
    %106 = vmatprep.subr.bf16.mxu0 0
    %107 = vmatpush1.bf16.msra.mxu0 0
    %108 = vmatprep.subr.bf16.mxu0 0
    %109 = vmatpush1.bf16.msra.mxu0 0
    %110 = vmatprep.subr.bf16.mxu0 0
    %111 = vmatpush1.bf16.msra.mxu0 0
    %112 = vmatprep.subr.bf16.mxu0 0
    %113 = vmatpush1.bf16.msra.mxu0 0
    %114 = vmatprep.subr.bf16.mxu0 0
    %115 = vmatpush1.bf16.msra.mxu0 0
    %116 = vmatprep.subr.bf16.mxu0 0
    %117 = vmatpush1.bf16.msra.mxu0 0
    %118 = vmatprep.subr.bf16.mxu0 0
    %119 = vmatpush1.bf16.msra.mxu0 0
    %120 = vmatprep.subr.bf16.mxu0 0
    %121 = vmatpush1.bf16.msra.mxu0 0
    %122 = vmatprep.subr.bf16.mxu0 0
    %123 = vmatpush1.bf16.msra.mxu0 0
    %124 = vmatprep.subr.bf16.mxu0 0
    %125 = vmatpush1.bf16.msra.mxu0 0
    %126 = vmatprep.subr.bf16.mxu0 0
    %127 = vmatpush1.bf16.msra.mxu0 0
    %128 = vmatprep.mubr.bf16.mxu0 0
    %129 = vmatmul.mubr.bf16.gmra.mrb[0].mxu0 %v85
    %v130 = vpop.f32.mrb[0].mxu0
    %v131 = vadd.f32 %v75, %v130
    %v132 = vpop.f32.mrb[0].mxu0
    %v133 = vpop.f32.mrb[0].mxu0
    %v134 = vadd.f32 %v75, %v133
    %v135 = vpop.f32.mrb[0].mxu0
    %136 = vmatprep.mubr.bf16.mxu0 0
    %137 = vmatmul.mubr.bf16.gmra.mrb[0].mxu0 %v88
    %v138 = vpop.f32.mrb[0].mxu0
    %v139 = vadd.f32 %v75, %v138
    %v140 = vpop.f32.mrb[0].mxu0
    %v141 = vpop.f32.mrb[0].mxu0
    %v142 = vadd.f32 %v75, %v141
    %v143 = vpop.f32.mrb[0].mxu0
    %144 = vmatprep.mubr.bf16.mxu0 0
    %145 = vmatmul.mubr.bf16.gmra.mrb[0].mxu0 %v91
    %v146 = vpop.f32.mrb[0].mxu0
    %v147 = vadd.f32 %v75, %v146
    %v148 = vpop.f32.mrb[0].mxu0
    %v149 = vpop.f32.mrb[0].mxu0
    %v150 = vadd.f32 %v75, %v149
    %v151 = vpop.f32.mrb[0].mxu0
    %152 = vmatprep.mubr.bf16.mxu0 0
    %153 = vmatmul.mubr.bf16.gmra.mrb[0].mxu0 %v94
    %v154 = vpop.f32.mrb[0].mxu0
    %v155 = vadd.f32 %v75, %v154
    %v156 = vpop.f32.mrb[0].mxu0
    %v157 = vpop.f32.mrb[0].mxu0
    %v158 = vadd.f32 %v75, %v157
    %v159 = vpop.f32.mrb[0].mxu0
    %160 = vdwg.mxu0
    %161 = vst [vmem:[#allocation2] sm:$0xff] %v131
    %162 = vst [vmem:[#allocation2 + $0x8] sm:$0xff] %v134
    %163 = vst [vmem:[#allocation2 + $0x10] sm:$0xff] %v139
    %164 = vst [vmem:[#allocation2 + $0x18] sm:$0xff] %v142
    %165 = vst [vmem:[#allocation2 + $0x20] sm:$0xff] %v147
    %166 = vst [vmem:[#allocation2 + $0x28] sm:$0xff] %v150
    %167 = vst [vmem:[#allocation2 + $0x30] sm:$0xff] %v155
    %168 = vst [vmem:[#allocation2 + $0x38] sm:$0xff] %v158
    %v169 = vld [vmem:[#allocation3] sm:$0xf]
    %v170 = vld [vmem:[#allocation3 + $0x4] sm:$0xf]
    %v171 = vld [vmem:[#allocation3 + $0x8] sm:$0xf]
    %v172 = vld [vmem:[#allocation3 + $0xc] sm:$0xf]
    %v173 = vld [vmem:[#allocation3 + $0x10] sm:$0xf]
    %v174 = vld [vmem:[#allocation3 + $0x14] sm:$0xf]
    %v175 = vld [vmem:[#allocation3 + $0x18] sm:$0xf]
    %v176 = vld [vmem:[#allocation3 + $0x1c] sm:$0xf]
    %v177 = vld [vmem:[#allocation3 + $0x20] sm:$0xf]
    %v178 = vld [vmem:[#allocation3 + $0x24] sm:$0xf]
    %v179 = vld [vmem:[#allocation3 + $0x28] sm:$0xf]
    %v180 = vld [vmem:[#allocation3 + $0x2c] sm:$0xf]
    %v181 = vld [vmem:[#allocation3 + $0x30] sm:$0xf]
    %v182 = vld [vmem:[#allocation3 + $0x34] sm:$0xf]
    %v183 = vld [vmem:[#allocation3 + $0x38] sm:$0xf]
    %v184 = vld [vmem:[#allocation3 + $0x3c] sm:$0xf]
    %v185 = vld [vmem:[#allocation2] sm:$0xff]
    %v202 = vunpack.c.l.b16 %v169
    %v203 = vunpack.c.l.b16 %v170
    %v204 = vunpack.c.l.b16 %v171
    %v205 = vunpack.c.l.b16 %v172
    %v206 = vunpack.c.l.b16 %v173
    %v207 = vunpack.c.l.b16 %v174
    %v208 = vunpack.c.l.b16 %v175
    %v209 = vunpack.c.l.b16 %v176
    %v210 = vunpack.c.l.b16 %v177
    %v211 = vunpack.c.l.b16 %v178
    %v212 = vunpack.c.l.b16 %v179
    %v213 = vunpack.c.l.b16 %v180
    %v214 = vunpack.c.l.b16 %v181
    %v215 = vunpack.c.l.b16 %v182
    %v216 = vunpack.c.l.b16 %v183
    %v217 = vunpack.c.l.b16 %v184
    %v218 = vpack.c.b16 %v203, %v202
    %v219 = vpack.c.b16 %v205, %v204
    %v220 = vpack.c.b16 %v207, %v206
    %v221 = vpack.c.b16 %v209, %v208
    %v222 = vpack.c.b16 %v211, %v210
    %v223 = vpack.c.b16 %v213, %v212
    %v224 = vpack.c.b16 %v215, %v214
    %v225 = vpack.c.b16 %v217, %v216
    %234 = vmatprep.subr.bf16.mxu0 0
    %235 = vmatpush1.bf16.msra.mxu0 %v218
    %236 = vmatprep.subr.bf16.mxu0 0
    %237 = vmatpush1.bf16.msra.mxu0 %v219
    %238 = vmatprep.subr.bf16.mxu0 0
    %239 = vmatpush1.bf16.msra.mxu0 %v220
    %240 = vmatprep.subr.bf16.mxu0 0
    %241 = vmatpush1.bf16.msra.mxu0 %v221
    %242 = vmatprep.subr.bf16.mxu0 0
    %243 = vmatpush1.bf16.msra.mxu0 %v222
    %244 = vmatprep.subr.bf16.mxu0 0
    %245 = vmatpush1.bf16.msra.mxu0 %v223
    %246 = vmatprep.subr.bf16.mxu0 0
    %247 = vmatpush1.bf16.msra.mxu0 %v224
    %248 = vmatprep.subr.bf16.mxu0 0
    %249 = vmatpush1.bf16.msra.mxu0 %v225
    %250 = vmatprep.subr.bf16.mxu0 0
    %251 = vmatpush1.bf16.msra.mxu0 0
    %252 = vmatprep.subr.bf16.mxu0 0
    %253 = vmatpush1.bf16.msra.mxu0 0
    %254 = vmatprep.subr.bf16.mxu0 0
    %255 = vmatpush1.bf16.msra.mxu0 0
    %256 = vmatprep.subr.bf16.mxu0 0
    %257 = vmatpush1.bf16.msra.mxu0 0
    %258 = vmatprep.subr.bf16.mxu0 0
    %259 = vmatpush1.bf16.msra.mxu0 0
    %260 = vmatprep.subr.bf16.mxu0 0
    %261 = vmatpush1.bf16.msra.mxu0 0
    %262 = vmatprep.subr.bf16.mxu0 0
    %263 = vmatpush1.bf16.msra.mxu0 0
    %264 = vmatprep.subr.bf16.mxu0 0
    %265 = vmatpush1.bf16.msra.mxu0 0
    %266 = vmatprep.mubr.bf16.mxu0 0
    %267 = vmatmul.mubr.bf16.gmra.mrb[0].mxu0 0
    %v268 = vpop.f32.mrb[0].mxu0
    %v269 = vadd.f32 0.0, %v268
    %v270 = vpop.f32.mrb[0].mxu0
    %v271 = vpop.f32.mrb[0].mxu0
    %v272 = vpop.f32.mrb[0].mxu0
    %273 = vdwg.mxu0
    %v274 = vadd.f32 %v185, %v269
    %v275 = vtanh.pop %v274
    %276 = vst [vmem:[#allocation2] sm:$0xff] %v275
    %s277 = scalar_lea.vmem [#allocation2], 8
    %v278 = vld [vmem:[%s277] sm:$0xff]
    %v279 = vpack.c.bf16 %v275, %v275
    %280 = vmatprep.subr.bf16.mxu0 0
    %281 = vmatpush1.bf16.msra.mxu0 %v218
    %282 = vmatprep.subr.bf16.mxu0 0
    %283 = vmatpush1.bf16.msra.mxu0 %v219
    %284 = vmatprep.subr.bf16.mxu0 0
    %285 = vmatpush1.bf16.msra.mxu0 %v220
    %286 = vmatprep.subr.bf16.mxu0 0
    %287 = vmatpush1.bf16.msra.mxu0 %v221
    %288 = vmatprep.subr.bf16.mxu0 0
    %289 = vmatpush1.bf16.msra.mxu0 %v222
    %290 = vmatprep.subr.bf16.mxu0 0
    %291 = vmatpush1.bf16.msra.mxu0 %v223
    %292 = vmatprep.subr.bf16.mxu0 0
    %293 = vmatpush1.bf16.msra.mxu0 %v224
    %294 = vmatprep.subr.bf16.mxu0 0
    %295 = vmatpush1.bf16.msra.mxu0 %v225
    %296 = vmatprep.subr.bf16.mxu0 0
    %297 = vmatpush1.bf16.msra.mxu0 0
    %298 = vmatprep.subr.bf16.mxu0 0
    %299 = vmatpush1.bf16.msra.mxu0 0
    %300 = vmatprep.subr.bf16.mxu0 0
    %301 = vmatpush1.bf16.msra.mxu0 0
    %302 = vmatprep.subr.bf16.mxu0 0
    %303 = vmatpush1.bf16.msra.mxu0 0
    %304 = vmatprep.subr.bf16.mxu0 0
    %305 = vmatpush1.bf16.msra.mxu0 0
    %306 = vmatprep.subr.bf16.mxu0 0
    %307 = vmatpush1.bf16.msra.mxu0 0
    %308 = vmatprep.subr.bf16.mxu0 0
    %309 = vmatpush1.bf16.msra.mxu0 0
    %310 = vmatprep.subr.bf16.mxu0 0
    %311 = vmatpush1.bf16.msra.mxu0 0
    %312 = vmatprep.mubr.bf16.mxu0 0
    %313 = vmatmul.mubr.bf16.gmra.mrb[0].mxu0 %v279
    %v314 = vpop.f32.mrb[0].mxu0
    %v315 = vadd.f32 0.0, %v314
    %v316 = vpop.f32.mrb[0].mxu0
    %v317 = vpop.f32.mrb[0].mxu0
    %v318 = vpop.f32.mrb[0].mxu0
    %319 = vdwg.mxu0
    %v320 = vadd.f32 %v278, %v315
    %v321 = vtanh.pop %v320
    %322 = vst [vmem:[%s277] sm:$0xff] %v321
    %s323 = scalar_lea.vmem [#allocation2], 16
    %v324 = vld [vmem:[%s323] sm:$0xff]
    %v325 = vpack.c.bf16 %v321, %v321
    %326 = vmatprep.subr.bf16.mxu0 0
    %327 = vmatpush1.bf16.msra.mxu0 %v218
    %328 = vmatprep.subr.bf16.mxu0 0
    %329 = vmatpush1.bf16.msra.mxu0 %v219
    %330 = vmatprep.subr.bf16.mxu0 0
    %331 = vmatpush1.bf16.msra.mxu0 %v220
    %332 = vmatprep.subr.bf16.mxu0 0
    %333 = vmatpush1.bf16.msra.mxu0 %v221
    %334 = vmatprep.subr.bf16.mxu0 0
    %335 = vmatpush1.bf16.msra.mxu0 %v222
    %336 = vmatprep.subr.bf16.mxu0 0
    %337 = vmatpush1.bf16.msra.mxu0 %v223
    %338 = vmatprep.subr.bf16.mxu0 0
    %339 = vmatpush1.bf16.msra.mxu0 %v224
    %340 = vmatprep.subr.bf16.mxu0 0
    %341 = vmatpush1.bf16.msra.mxu0 %v225
    %342 = vmatprep.subr.bf16.mxu0 0
    %343 = vmatpush1.bf16.msra.mxu0 0
    %344 = vmatprep.subr.bf16.mxu0 0
    %345 = vmatpush1.bf16.msra.mxu0 0
    %346 = vmatprep.subr.bf16.mxu0 0
    %347 = vmatpush1.bf16.msra.mxu0 0
    %348 = vmatprep.subr.bf16.mxu0 0
    %349 = vmatpush1.bf16.msra.mxu0 0
    %350 = vmatprep.subr.bf16.mxu0 0
    %351 = vmatpush1.bf16.msra.mxu0 0
    %352 = vmatprep.subr.bf16.mxu0 0
    %353 = vmatpush1.bf16.msra.mxu0 0
    %354 = vmatprep.subr.bf16.mxu0 0
    %355 = vmatpush1.bf16.msra.mxu0 0
    %356 = vmatprep.subr.bf16.mxu0 0
    %357 = vmatpush1.bf16.msra.mxu0 0
    %358 = vmatprep.mubr.bf16.mxu0 0
    %359 = vmatmul.mubr.bf16.gmra.mrb[0].mxu0 %v325
    %v360 = vpop.f32.mrb[0].mxu0
    %v361 = vadd.f32 0.0, %v360
    %v362 = vpop.f32.mrb[0].mxu0
    %v363 = vpop.f32.mrb[0].mxu0
    %v364 = vpop.f32.mrb[0].mxu0
    %365 = vdwg.mxu0
    %v366 = vadd.f32 %v324, %v361
    %v367 = vtanh.pop %v366
    %368 = vst [vmem:[%s323] sm:$0xff] %v367
    %s369 = scalar_lea.vmem [#allocation2], 24
    %v370 = vld [vmem:[%s369] sm:$0xff]
    %v371 = vpack.c.bf16 %v367, %v367
    %372 = vmatprep.subr.bf16.mxu0 0
    %373 = vmatpush1.bf16.msra.mxu0 %v218
    %374 = vmatprep.subr.bf16.mxu0 0
    %375 = vmatpush1.bf16.msra.mxu0 %v219
    %376 = vmatprep.subr.bf16.mxu0 0
    %377 = vmatpush1.bf16.msra.mxu0 %v220
    %378 = vmatprep.subr.bf16.mxu0 0
    %379 = vmatpush1.bf16.msra.mxu0 %v221
    %380 = vmatprep.subr.bf16.mxu0 0
    %381 = vmatpush1.bf16.msra.mxu0 %v222
    %382 = vmatprep.subr.bf16.mxu0 0
    %383 = vmatpush1.bf16.msra.mxu0 %v223
    %384 = vmatprep.subr.bf16.mxu0 0
    %385 = vmatpush1.bf16.msra.mxu0 %v224
    %386 = vmatprep.subr.bf16.mxu0 0
    %387 = vmatpush1.bf16.msra.mxu0 %v225
    %388 = vmatprep.subr.bf16.mxu0 0
    %389 = vmatpush1.bf16.msra.mxu0 0
    %390 = vmatprep.subr.bf16.mxu0 0
    %391 = vmatpush1.bf16.msra.mxu0 0
    %392 = vmatprep.subr.bf16.mxu0 0
    %393 = vmatpush1.bf16.msra.mxu0 0
    %394 = vmatprep.subr.bf16.mxu0 0
    %395 = vmatpush1.bf16.msra.mxu0 0
    %396 = vmatprep.subr.bf16.mxu0 0
    %397 = vmatpush1.bf16.msra.mxu0 0
    %398 = vmatprep.subr.bf16.mxu0 0
    %399 = vmatpush1.bf16.msra.mxu0 0
    %400 = vmatprep.subr.bf16.mxu0 0
    %401 = vmatpush1.bf16.msra.mxu0 0
    %402 = vmatprep.subr.bf16.mxu0 0
    %403 = vmatpush1.bf16.msra.mxu0 0
    %404 = vmatprep.mubr.bf16.mxu0 0
    %405 = vmatmul.mubr.bf16.gmra.mrb[0].mxu0 %v371
    %v406 = vpop.f32.mrb[0].mxu0
    %v407 = vadd.f32 0.0, %v406
    %v408 = vpop.f32.mrb[0].mxu0
    %v409 = vpop.f32.mrb[0].mxu0
    %v410 = vpop.f32.mrb[0].mxu0
    %411 = vdwg.mxu0
    %v412 = vadd.f32 %v370, %v407
    %v413 = vtanh.pop %v412
    %414 = vst [vmem:[%s369] sm:$0xff] %v413
    %s415 = scalar_lea.vmem [#allocation2], 32
    %v416 = vld [vmem:[%s415] sm:$0xff]
    %v417 = vpack.c.bf16 %v413, %v413
    %418 = vmatprep.subr.bf16.mxu0 0
    %419 = vmatpush1.bf16.msra.mxu0 %v218
    %420 = vmatprep.subr.bf16.mxu0 0
    %421 = vmatpush1.bf16.msra.mxu0 %v219
    %422 = vmatprep.subr.bf16.mxu0 0
    %423 = vmatpush1.bf16.msra.mxu0 %v220
    %424 = vmatprep.subr.bf16.mxu0 0
    %425 = vmatpush1.bf16.msra.mxu0 %v221
    %426 = vmatprep.subr.bf16.mxu0 0
    %427 = vmatpush1.bf16.msra.mxu0 %v222
    %428 = vmatprep.subr.bf16.mxu0 0
    %429 = vmatpush1.bf16.msra.mxu0 %v223
    %430 = vmatprep.subr.bf16.mxu0 0
    %431 = vmatpush1.bf16.msra.mxu0 %v224
    %432 = vmatprep.subr.bf16.mxu0 0
    %433 = vmatpush1.bf16.msra.mxu0 %v225
    %434 = vmatprep.subr.bf16.mxu0 0
    %435 = vmatpush1.bf16.msra.mxu0 0
    %436 = vmatprep.subr.bf16.mxu0 0
    %437 = vmatpush1.bf16.msra.mxu0 0
    %438 = vmatprep.subr.bf16.mxu0 0
    %439 = vmatpush1.bf16.msra.mxu0 0
    %440 = vmatprep.subr.bf16.mxu0 0
    %441 = vmatpush1.bf16.msra.mxu0 0
    %442 = vmatprep.subr.bf16.mxu0 0
    %443 = vmatpush1.bf16.msra.mxu0 0
    %444 = vmatprep.subr.bf16.mxu0 0
    %445 = vmatpush1.bf16.msra.mxu0 0
    %446 = vmatprep.subr.bf16.mxu0 0
    %447 = vmatpush1.bf16.msra.mxu0 0
    %448 = vmatprep.subr.bf16.mxu0 0
    %449 = vmatpush1.bf16.msra.mxu0 0
    %450 = vmatprep.mubr.bf16.mxu0 0
    %451 = vmatmul.mubr.bf16.gmra.mrb[0].mxu0 %v417
    %v452 = vpop.f32.mrb[0].mxu0
    %v453 = vadd.f32 0.0, %v452
    %v454 = vpop.f32.mrb[0].mxu0
    %v455 = vpop.f32.mrb[0].mxu0
    %v456 = vpop.f32.mrb[0].mxu0
    %457 = vdwg.mxu0
    %v458 = vadd.f32 %v416, %v453
    %v459 = vtanh.pop %v458
    %460 = vst [vmem:[%s415] sm:$0xff] %v459
    %s461 = scalar_lea.vmem [#allocation2], 40
    %v462 = vld [vmem:[%s461] sm:$0xff]
    %v463 = vpack.c.bf16 %v459, %v459
    %464 = vmatprep.subr.bf16.mxu0 0
    %465 = vmatpush1.bf16.msra.mxu0 %v218
    %466 = vmatprep.subr.bf16.mxu0 0
    %467 = vmatpush1.bf16.msra.mxu0 %v219
    %468 = vmatprep.subr.bf16.mxu0 0
    %469 = vmatpush1.bf16.msra.mxu0 %v220
    %470 = vmatprep.subr.bf16.mxu0 0
    %471 = vmatpush1.bf16.msra.mxu0 %v221
    %472 = vmatprep.subr.bf16.mxu0 0
    %473 = vmatpush1.bf16.msra.mxu0 %v222
    %474 = vmatprep.subr.bf16.mxu0 0
    %475 = vmatpush1.bf16.msra.mxu0 %v223
    %476 = vmatprep.subr.bf16.mxu0 0
    %477 = vmatpush1.bf16.msra.mxu0 %v224
    %478 = vmatprep.subr.bf16.mxu0 0
    %479 = vmatpush1.bf16.msra.mxu0 %v225
    %480 = vmatprep.subr.bf16.mxu0 0
    %481 = vmatpush1.bf16.msra.mxu0 0
    %482 = vmatprep.subr.bf16.mxu0 0
    %483 = vmatpush1.bf16.msra.mxu0 0
    %484 = vmatprep.subr.bf16.mxu0 0
    %485 = vmatpush1.bf16.msra.mxu0 0
    %486 = vmatprep.subr.bf16.mxu0 0
    %487 = vmatpush1.bf16.msra.mxu0 0
    %488 = vmatprep.subr.bf16.mxu0 0
    %489 = vmatpush1.bf16.msra.mxu0 0
    %490 = vmatprep.subr.bf16.mxu0 0
    %491 = vmatpush1.bf16.msra.mxu0 0
    %492 = vmatprep.subr.bf16.mxu0 0
    %493 = vmatpush1.bf16.msra.mxu0 0
    %494 = vmatprep.subr.bf16.mxu0 0
    %495 = vmatpush1.bf16.msra.mxu0 0
    %496 = vmatprep.mubr.bf16.mxu0 0
    %497 = vmatmul.mubr.bf16.gmra.mrb[0].mxu0 %v463
    %v498 = vpop.f32.mrb[0].mxu0
    %v499 = vadd.f32 0.0, %v498
    %v500 = vpop.f32.mrb[0].mxu0
    %v501 = vpop.f32.mrb[0].mxu0
    %v502 = vpop.f32.mrb[0].mxu0
    %503 = vdwg.mxu0
    %v504 = vadd.f32 %v462, %v499
    %v505 = vtanh.pop %v504
    %506 = vst [vmem:[%s461] sm:$0xff] %v505
    %s507 = scalar_lea.vmem [#allocation2], 48
    %v508 = vld [vmem:[%s507] sm:$0xff]
    %v509 = vpack.c.bf16 %v505, %v505
    %510 = vmatprep.subr.bf16.mxu0 0
    %511 = vmatpush1.bf16.msra.mxu0 %v218
    %512 = vmatprep.subr.bf16.mxu0 0
    %513 = vmatpush1.bf16.msra.mxu0 %v219
    %514 = vmatprep.subr.bf16.mxu0 0
    %515 = vmatpush1.bf16.msra.mxu0 %v220
    %516 = vmatprep.subr.bf16.mxu0 0
    %517 = vmatpush1.bf16.msra.mxu0 %v221
    %518 = vmatprep.subr.bf16.mxu0 0
    %519 = vmatpush1.bf16.msra.mxu0 %v222
    %520 = vmatprep.subr.bf16.mxu0 0
    %521 = vmatpush1.bf16.msra.mxu0 %v223
    %522 = vmatprep.subr.bf16.mxu0 0
    %523 = vmatpush1.bf16.msra.mxu0 %v224
    %524 = vmatprep.subr.bf16.mxu0 0
    %525 = vmatpush1.bf16.msra.mxu0 %v225
    %526 = vmatprep.subr.bf16.mxu0 0
    %527 = vmatpush1.bf16.msra.mxu0 0
    %528 = vmatprep.subr.bf16.mxu0 0
    %529 = vmatpush1.bf16.msra.mxu0 0
    %530 = vmatprep.subr.bf16.mxu0 0
    %531 = vmatpush1.bf16.msra.mxu0 0
    %532 = vmatprep.subr.bf16.mxu0 0
    %533 = vmatpush1.bf16.msra.mxu0 0
    %534 = vmatprep.subr.bf16.mxu0 0
    %535 = vmatpush1.bf16.msra.mxu0 0
    %536 = vmatprep.subr.bf16.mxu0 0
    %537 = vmatpush1.bf16.msra.mxu0 0
    %538 = vmatprep.subr.bf16.mxu0 0
    %539 = vmatpush1.bf16.msra.mxu0 0
    %540 = vmatprep.subr.bf16.mxu0 0
    %541 = vmatpush1.bf16.msra.mxu0 0
    %542 = vmatprep.mubr.bf16.mxu0 0
    %543 = vmatmul.mubr.bf16.gmra.mrb[0].mxu0 %v509
    %v544 = vpop.f32.mrb[0].mxu0
    %v545 = vadd.f32 0.0, %v544
    %v546 = vpop.f32.mrb[0].mxu0
    %v547 = vpop.f32.mrb[0].mxu0
    %v548 = vpop.f32.mrb[0].mxu0
    %549 = vdwg.mxu0
    %v550 = vadd.f32 %v508, %v545
    %v551 = vtanh.pop %v550
    %552 = vst [vmem:[%s507] sm:$0xff] %v551
    %s553 = scalar_lea.vmem [#allocation2], 56
    %v554 = vld [vmem:[%s553] sm:$0xff]
    %v555 = vpack.c.bf16 %v551, %v551
    %556 = vmatprep.subr.bf16.mxu0 0
    %557 = vmatpush1.bf16.msra.mxu0 %v218
    %558 = vmatprep.subr.bf16.mxu0 0
    %559 = vmatpush1.bf16.msra.mxu0 %v219
    %560 = vmatprep.subr.bf16.mxu0 0
    %561 = vmatpush1.bf16.msra.mxu0 %v220
    %562 = vmatprep.subr.bf16.mxu0 0
    %563 = vmatpush1.bf16.msra.mxu0 %v221
    %564 = vmatprep.subr.bf16.mxu0 0
    %565 = vmatpush1.bf16.msra.mxu0 %v222
    %566 = vmatprep.subr.bf16.mxu0 0
    %567 = vmatpush1.bf16.msra.mxu0 %v223
    %568 = vmatprep.subr.bf16.mxu0 0
    %569 = vmatpush1.bf16.msra.mxu0 %v224
    %570 = vmatprep.subr.bf16.mxu0 0
    %571 = vmatpush1.bf16.msra.mxu0 %v225
    %572 = vmatprep.subr.bf16.mxu0 0
    %573 = vmatpush1.bf16.msra.mxu0 0
    %574 = vmatprep.subr.bf16.mxu0 0
    %575 = vmatpush1.bf16.msra.mxu0 0
    %576 = vmatprep.subr.bf16.mxu0 0
    %577 = vmatpush1.bf16.msra.mxu0 0
    %578 = vmatprep.subr.bf16.mxu0 0
    %579 = vmatpush1.bf16.msra.mxu0 0
    %580 = vmatprep.subr.bf16.mxu0 0
    %581 = vmatpush1.bf16.msra.mxu0 0
    %582 = vmatprep.subr.bf16.mxu0 0
    %583 = vmatpush1.bf16.msra.mxu0 0
    %584 = vmatprep.subr.bf16.mxu0 0
    %585 = vmatpush1.bf16.msra.mxu0 0
    %586 = vmatprep.subr.bf16.mxu0 0
    %587 = vmatpush1.bf16.msra.mxu0 0
    %588 = vmatprep.mubr.bf16.mxu0 0
    %589 = vmatmul.mubr.bf16.gmra.mrb[0].mxu0 %v555
    %v590 = vpop.f32.mrb[0].mxu0
    %v591 = vadd.f32 0.0, %v590
    %v592 = vpop.f32.mrb[0].mxu0
    %v593 = vpop.f32.mrb[0].mxu0
    %v594 = vpop.f32.mrb[0].mxu0
    %595 = vdwg.mxu0
    %v596 = vadd.f32 %v554, %v591
    %v597 = vtanh.pop %v596
    %598 = vst [vmem:[%s553] sm:$0xff] %v597
    %v599 = vld [vmem:[#allocation2] sm:$0xff]
    %v600 = vld [vmem:[#allocation2 + $0x8] sm:$0xff]
    %v601 = vld [vmem:[#allocation2 + $0x10] sm:$0xff]
    %v602 = vld [vmem:[#allocation2 + $0x18] sm:$0xff]
    %v603 = vld [vmem:[#allocation2 + $0x20] sm:$0xff]
    %v604 = vld [vmem:[#allocation2 + $0x28] sm:$0xff]
    %v605 = vld [vmem:[#allocation2 + $0x30] sm:$0xff]
    %v606 = vld [vmem:[#allocation2 + $0x38] sm:$0xff]
    %v607 = vpack.c.bf16 %v600, %v599
    %v608 = vpack.c.bf16 %v602, %v601
    %v609 = vpack.c.bf16 %v604, %v603
    %v610 = vpack.c.bf16 %v606, %v605
    %v611 = vld [vmem:[%s2] sm:$0xf]
    %v612 = vld [vmem:[%s2 + $0x4] sm:$0xf]
    %v613 = vld [vmem:[%s2 + $0x8] sm:$0xf]
    %v614 = vld [vmem:[%s2 + $0xc] sm:$0xf]
    %v615 = vld [vmem:[%s2 + $0x10] sm:$0xf]
    %v616 = vld [vmem:[%s2 + $0x14] sm:$0xf]
    %v617 = vld [vmem:[%s2 + $0x18] sm:$0xf]
    %v618 = vld [vmem:[%s2 + $0x1c] sm:$0xf]
    %v619 = vld [vmem:[%s2 + $0x20] sm:$0xf]
    %v620 = vld [vmem:[%s2 + $0x24] sm:$0xf]
    %v621 = vld [vmem:[%s2 + $0x28] sm:$0xf]
    %v622 = vld [vmem:[%s2 + $0x2c] sm:$0xf]
    %v623 = vld [vmem:[%s2 + $0x30] sm:$0xf]
    %v624 = vld [vmem:[%s2 + $0x34] sm:$0xf]
    %v625 = vld [vmem:[%s2 + $0x38] sm:$0xf]
    %v626 = vld [vmem:[%s2 + $0x3c] sm:$0xf]
    %s627 = scalar_lea.vmem %s4, 1
    %v628 = vld [vmem:[%s627] sm:$0x1]
    %v630 = vlaneseq
    %v631 = vshrl.u32 %v630, 7
    %v632 = vsub.s32 0, %v631
    %v633 = vrot.slane %v628, %v632
    %v651 = vunpack.c.l.b16 %v611
    %v652 = vunpack.c.l.b16 %v612
    %v653 = vunpack.c.l.b16 %v613
    %v654 = vunpack.c.l.b16 %v614
    %v655 = vunpack.c.l.b16 %v615
    %v656 = vunpack.c.l.b16 %v616
    %v657 = vunpack.c.l.b16 %v617
    %v658 = vunpack.c.l.b16 %v618
    %v659 = vunpack.c.l.b16 %v619
    %v660 = vunpack.c.l.b16 %v620
    %v661 = vunpack.c.l.b16 %v621
    %v662 = vunpack.c.l.b16 %v622
    %v663 = vunpack.c.l.b16 %v623
    %v664 = vunpack.c.l.b16 %v624
    %v665 = vunpack.c.l.b16 %v625
    %v666 = vunpack.c.l.b16 %v626
    %v667 = vpack.c.b16 %v652, %v651
    %v668 = vpack.c.b16 %v654, %v653
    %v669 = vpack.c.b16 %v656, %v655
    %v670 = vpack.c.b16 %v658, %v657
    %v671 = vpack.c.b16 %v660, %v659
    %v672 = vpack.c.b16 %v662, %v661
    %v673 = vpack.c.b16 %v664, %v663
    %v674 = vpack.c.b16 %v666, %v665
    %683 = vmatprep.subr.bf16.mxu0 0
    %684 = vmatpush1.bf16.msra.mxu0 %v667
    %685 = vmatprep.subr.bf16.mxu0 0
    %686 = vmatpush1.bf16.msra.mxu0 %v668
    %687 = vmatprep.subr.bf16.mxu0 0
    %688 = vmatpush1.bf16.msra.mxu0 %v669
    %689 = vmatprep.subr.bf16.mxu0 0
    %690 = vmatpush1.bf16.msra.mxu0 %v670
    %691 = vmatprep.subr.bf16.mxu0 0
    %692 = vmatpush1.bf16.msra.mxu0 %v671
    %693 = vmatprep.subr.bf16.mxu0 0
    %694 = vmatpush1.bf16.msra.mxu0 %v672
    %695 = vmatprep.subr.bf16.mxu0 0
    %696 = vmatpush1.bf16.msra.mxu0 %v673
    %697 = vmatprep.subr.bf16.mxu0 0
    %698 = vmatpush1.bf16.msra.mxu0 %v674
    %699 = vmatprep.subr.bf16.mxu0 0
    %700 = vmatpush1.bf16.msra.mxu0 0
    %701 = vmatprep.subr.bf16.mxu0 0
    %702 = vmatpush1.bf16.msra.mxu0 0
    %703 = vmatprep.subr.bf16.mxu0 0
    %704 = vmatpush1.bf16.msra.mxu0 0
    %705 = vmatprep.subr.bf16.mxu0 0
    %706 = vmatpush1.bf16.msra.mxu0 0
    %707 = vmatprep.subr.bf16.mxu0 0
    %708 = vmatpush1.bf16.msra.mxu0 0
    %709 = vmatprep.subr.bf16.mxu0 0
    %710 = vmatpush1.bf16.msra.mxu0 0
    %711 = vmatprep.subr.bf16.mxu0 0
    %712 = vmatpush1.bf16.msra.mxu0 0
    %713 = vmatprep.subr.bf16.mxu0 0
    %714 = vmatpush1.bf16.msra.mxu0 0
    %715 = vmatprep.mubr.bf16.mxu0 0
    %716 = vmatmul.mubr.bf16.gmra.mrb[0].mxu0 %v607
    %v717 = vpop.f32.mrb[0].mxu0
    %v718 = vadd.f32 %v633, %v717
    %v719 = vpop.f32.mrb[0].mxu0
    %v720 = vpop.f32.mrb[0].mxu0
    %v721 = vadd.f32 %v633, %v720
    %v722 = vpop.f32.mrb[0].mxu0
    %723 = vmatprep.mubr.bf16.mxu0 0
    %724 = vmatmul.mubr.bf16.gmra.mrb[0].mxu0 %v608
    %v725 = vpop.f32.mrb[0].mxu0
    %v726 = vadd.f32 %v633, %v725
    %v727 = vpop.f32.mrb[0].mxu0
    %v728 = vpop.f32.mrb[0].mxu0
    %v729 = vadd.f32 %v633, %v728
    %v730 = vpop.f32.mrb[0].mxu0
    %731 = vmatprep.mubr.bf16.mxu0 0
    %732 = vmatmul.mubr.bf16.gmra.mrb[0].mxu0 %v609
    %v733 = vpop.f32.mrb[0].mxu0
    %v734 = vadd.f32 %v633, %v733
    %v735 = vpop.f32.mrb[0].mxu0
    %v736 = vpop.f32.mrb[0].mxu0
    %v737 = vadd.f32 %v633, %v736
    %v738 = vpop.f32.mrb[0].mxu0
    %739 = vmatprep.mubr.bf16.mxu0 0
    %740 = vmatmul.mubr.bf16.gmra.mrb[0].mxu0 %v610
    %v741 = vpop.f32.mrb[0].mxu0
    %v742 = vadd.f32 %v633, %v741
    %v743 = vpop.f32.mrb[0].mxu0
    %v744 = vpop.f32.mrb[0].mxu0
    %v745 = vadd.f32 %v633, %v744
    %v746 = vpop.f32.mrb[0].mxu0
    %747 = vdwg.mxu0
    %748 = vst [vmem:[#allocation2] sm:$0xff] %v718
    %749 = vst [vmem:[#allocation2 + $0x8] sm:$0xff] %v721
    %750 = vst [vmem:[#allocation2 + $0x10] sm:$0xff] %v726
    %751 = vst [vmem:[#allocation2 + $0x18] sm:$0xff] %v729
    %752 = vst [vmem:[#allocation2 + $0x20] sm:$0xff] %v734
    %753 = vst [vmem:[#allocation2 + $0x28] sm:$0xff] %v737
    %754 = vst [vmem:[#allocation2 + $0x30] sm:$0xff] %v742
    %755 = vst [vmem:[#allocation2 + $0x38] sm:$0xff] %v745
    %s756 = scalar_lea.vmem [#allocation3], 64
    %v757 = vld [vmem:[%s756] sm:$0xf]
    %v758 = vld [vmem:[%s756 + $0x4] sm:$0xf]
    %v759 = vld [vmem:[%s756 + $0x8] sm:$0xf]
    %v760 = vld [vmem:[%s756 + $0xc] sm:$0xf]
    %v761 = vld [vmem:[%s756 + $0x10] sm:$0xf]
    %v762 = vld [vmem:[%s756 + $0x14] sm:$0xf]
    %v763 = vld [vmem:[%s756 + $0x18] sm:$0xf]
    %v764 = vld [vmem:[%s756 + $0x1c] sm:$0xf]
    %v765 = vld [vmem:[%s756 + $0x20] sm:$0xf]
    %v766 = vld [vmem:[%s756 + $0x24] sm:$0xf]
    %v767 = vld [vmem:[%s756 + $0x28] sm:$0xf]
    %v768 = vld [vmem:[%s756 + $0x2c] sm:$0xf]
    %v769 = vld [vmem:[%s756 + $0x30] sm:$0xf]
    %v770 = vld [vmem:[%s756 + $0x34] sm:$0xf]
    %v771 = vld [vmem:[%s756 + $0x38] sm:$0xf]
    %v772 = vld [vmem:[%s756 + $0x3c] sm:$0xf]
    %v773 = vld [vmem:[#allocation2] sm:$0xff]
    %v790 = vunpack.c.l.b16 %v757
    %v791 = vunpack.c.l.b16 %v758
    %v792 = vunpack.c.l.b16 %v759
    %v793 = vunpack.c.l.b16 %v760
    %v794 = vunpack.c.l.b16 %v761
    %v795 = vunpack.c.l.b16 %v762
    %v796 = vunpack.c.l.b16 %v763
    %v797 = vunpack.c.l.b16 %v764
    %v798 = vunpack.c.l.b16 %v765
    %v799 = vunpack.c.l.b16 %v766
    %v800 = vunpack.c.l.b16 %v767
    %v801 = vunpack.c.l.b16 %v768
    %v802 = vunpack.c.l.b16 %v769
    %v803 = vunpack.c.l.b16 %v770
    %v804 = vunpack.c.l.b16 %v771
    %v805 = vunpack.c.l.b16 %v772
    %v806 = vpack.c.b16 %v791, %v790
    %v807 = vpack.c.b16 %v793, %v792
    %v808 = vpack.c.b16 %v795, %v794
    %v809 = vpack.c.b16 %v797, %v796
    %v810 = vpack.c.b16 %v799, %v798
    %v811 = vpack.c.b16 %v801, %v800
    %v812 = vpack.c.b16 %v803, %v802
    %v813 = vpack.c.b16 %v805, %v804
    %822 = vmatprep.subr.bf16.mxu0 0
    %823 = vmatpush1.bf16.msra.mxu0 %v806
    %824 = vmatprep.subr.bf16.mxu0 0
    %825 = vmatpush1.bf16.msra.mxu0 %v807
    %826 = vmatprep.subr.bf16.mxu0 0
    %827 = vmatpush1.bf16.msra.mxu0 %v808
    %828 = vmatprep.subr.bf16.mxu0 0
    %829 = vmatpush1.bf16.msra.mxu0 %v809
    %830 = vmatprep.subr.bf16.mxu0 0
    %831 = vmatpush1.bf16.msra.mxu0 %v810
    %832 = vmatprep.subr.bf16.mxu0 0
    %833 = vmatpush1.bf16.msra.mxu0 %v811
    %834 = vmatprep.subr.bf16.mxu0 0
    %835 = vmatpush1.bf16.msra.mxu0 %v812
    %836 = vmatprep.subr.bf16.mxu0 0
    %837 = vmatpush1.bf16.msra.mxu0 %v813
    %838 = vmatprep.subr.bf16.mxu0 0
    %839 = vmatpush1.bf16.msra.mxu0 0
    %840 = vmatprep.subr.bf16.mxu0 0
    %841 = vmatpush1.bf16.msra.mxu0 0
    %842 = vmatprep.subr.bf16.mxu0 0
    %843 = vmatpush1.bf16.msra.mxu0 0
    %844 = vmatprep.subr.bf16.mxu0 0
    %845 = vmatpush1.bf16.msra.mxu0 0
    %846 = vmatprep.subr.bf16.mxu0 0
    %847 = vmatpush1.bf16.msra.mxu0 0
    %848 = vmatprep.subr.bf16.mxu0 0
    %849 = vmatpush1.bf16.msra.mxu0 0
    %850 = vmatprep.subr.bf16.mxu0 0
    %851 = vmatpush1.bf16.msra.mxu0 0
    %852 = vmatprep.subr.bf16.mxu0 0
    %853 = vmatpush1.bf16.msra.mxu0 0
    %854 = vmatprep.mubr.bf16.mxu0 0
    %855 = vmatmul.mubr.bf16.gmra.mrb[0].mxu0 0
    %v856 = vpop.f32.mrb[0].mxu0
    %v857 = vadd.f32 0.0, %v856
    %v858 = vpop.f32.mrb[0].mxu0
    %v859 = vpop.f32.mrb[0].mxu0
    %v860 = vpop.f32.mrb[0].mxu0
    %861 = vdwg.mxu0
    %v862 = vadd.f32 %v773, %v857
    %v863 = vtanh.pop %v862
    %v864 = vld [vmem:[%s277] sm:$0xff]
    %v865 = vpack.c.bf16 %v863, %v863
    %866 = vmatprep.subr.bf16.mxu0 0
    %867 = vmatpush1.bf16.msra.mxu0 %v806
    %868 = vmatprep.subr.bf16.mxu0 0
    %869 = vmatpush1.bf16.msra.mxu0 %v807
    %870 = vmatprep.subr.bf16.mxu0 0
    %871 = vmatpush1.bf16.msra.mxu0 %v808
    %872 = vmatprep.subr.bf16.mxu0 0
    %873 = vmatpush1.bf16.msra.mxu0 %v809
    %874 = vmatprep.subr.bf16.mxu0 0
    %875 = vmatpush1.bf16.msra.mxu0 %v810
    %876 = vmatprep.subr.bf16.mxu0 0
    %877 = vmatpush1.bf16.msra.mxu0 %v811
    %878 = vmatprep.subr.bf16.mxu0 0
    %879 = vmatpush1.bf16.msra.mxu0 %v812
    %880 = vmatprep.subr.bf16.mxu0 0
    %881 = vmatpush1.bf16.msra.mxu0 %v813
    %882 = vmatprep.subr.bf16.mxu0 0
    %883 = vmatpush1.bf16.msra.mxu0 0
    %884 = vmatprep.subr.bf16.mxu0 0
    %885 = vmatpush1.bf16.msra.mxu0 0
    %886 = vmatprep.subr.bf16.mxu0 0
    %887 = vmatpush1.bf16.msra.mxu0 0
    %888 = vmatprep.subr.bf16.mxu0 0
    %889 = vmatpush1.bf16.msra.mxu0 0
    %890 = vmatprep.subr.bf16.mxu0 0
    %891 = vmatpush1.bf16.msra.mxu0 0
    %892 = vmatprep.subr.bf16.mxu0 0
    %893 = vmatpush1.bf16.msra.mxu0 0
    %894 = vmatprep.subr.bf16.mxu0 0
    %895 = vmatpush1.bf16.msra.mxu0 0
    %896 = vmatprep.subr.bf16.mxu0 0
    %897 = vmatpush1.bf16.msra.mxu0 0
    %898 = vmatprep.mubr.bf16.mxu0 0
    %899 = vmatmul.mubr.bf16.gmra.mrb[0].mxu0 %v865
    %v900 = vpop.f32.mrb[0].mxu0
    %v901 = vadd.f32 0.0, %v900
    %v902 = vpop.f32.mrb[0].mxu0
    %v903 = vpop.f32.mrb[0].mxu0
    %v904 = vpop.f32.mrb[0].mxu0
    %905 = vdwg.mxu0
    %v906 = vadd.f32 %v864, %v901
    %v907 = vtanh.pop %v906
    %v908 = vld [vmem:[%s323] sm:$0xff]
    %v909 = vpack.c.bf16 %v907, %v907
    %910 = vmatprep.subr.bf16.mxu0 0
    %911 = vmatpush1.bf16.msra.mxu0 %v806
    %912 = vmatprep.subr.bf16.mxu0 0
    %913 = vmatpush1.bf16.msra.mxu0 %v807
    %914 = vmatprep.subr.bf16.mxu0 0
    %915 = vmatpush1.bf16.msra.mxu0 %v808
    %916 = vmatprep.subr.bf16.mxu0 0
    %917 = vmatpush1.bf16.msra.mxu0 %v809
    %918 = vmatprep.subr.bf16.mxu0 0
    %919 = vmatpush1.bf16.msra.mxu0 %v810
    %920 = vmatprep.subr.bf16.mxu0 0
    %921 = vmatpush1.bf16.msra.mxu0 %v811
    %922 = vmatprep.subr.bf16.mxu0 0
    %923 = vmatpush1.bf16.msra.mxu0 %v812
    %924 = vmatprep.subr.bf16.mxu0 0
    %925 = vmatpush1.bf16.msra.mxu0 %v813
    %926 = vmatprep.subr.bf16.mxu0 0
    %927 = vmatpush1.bf16.msra.mxu0 0
    %928 = vmatprep.subr.bf16.mxu0 0
    %929 = vmatpush1.bf16.msra.mxu0 0
    %930 = vmatprep.subr.bf16.mxu0 0
    %931 = vmatpush1.bf16.msra.mxu0 0
    %932 = vmatprep.subr.bf16.mxu0 0
    %933 = vmatpush1.bf16.msra.mxu0 0
    %934 = vmatprep.subr.bf16.mxu0 0
    %935 = vmatpush1.bf16.msra.mxu0 0
    %936 = vmatprep.subr.bf16.mxu0 0
    %937 = vmatpush1.bf16.msra.mxu0 0
    %938 = vmatprep.subr.bf16.mxu0 0
    %939 = vmatpush1.bf16.msra.mxu0 0
    %940 = vmatprep.subr.bf16.mxu0 0
    %941 = vmatpush1.bf16.msra.mxu0 0
    %942 = vmatprep.mubr.bf16.mxu0 0
    %943 = vmatmul.mubr.bf16.gmra.mrb[0].mxu0 %v909
    %v944 = vpop.f32.mrb[0].mxu0
    %v945 = vadd.f32 0.0, %v944
    %v946 = vpop.f32.mrb[0].mxu0
    %v947 = vpop.f32.mrb[0].mxu0
    %v948 = vpop.f32.mrb[0].mxu0
    %949 = vdwg.mxu0
    %v950 = vadd.f32 %v908, %v945
    %v951 = vtanh.pop %v950
    %v952 = vld [vmem:[%s369] sm:$0xff]
    %v953 = vpack.c.bf16 %v951, %v951
    %954 = vmatprep.subr.bf16.mxu0 0
    %955 = vmatpush1.bf16.msra.mxu0 %v806
    %956 = vmatprep.subr.bf16.mxu0 0
    %957 = vmatpush1.bf16.msra.mxu0 %v807
    %958 = vmatprep.subr.bf16.mxu0 0
    %959 = vmatpush1.bf16.msra.mxu0 %v808
    %960 = vmatprep.subr.bf16.mxu0 0
    %961 = vmatpush1.bf16.msra.mxu0 %v809
    %962 = vmatprep.subr.bf16.mxu0 0
    %963 = vmatpush1.bf16.msra.mxu0 %v810
    %964 = vmatprep.subr.bf16.mxu0 0
    %965 = vmatpush1.bf16.msra.mxu0 %v811
    %966 = vmatprep.subr.bf16.mxu0 0
    %967 = vmatpush1.bf16.msra.mxu0 %v812
    %968 = vmatprep.subr.bf16.mxu0 0
    %969 = vmatpush1.bf16.msra.mxu0 %v813
    %970 = vmatprep.subr.bf16.mxu0 0
    %971 = vmatpush1.bf16.msra.mxu0 0
    %972 = vmatprep.subr.bf16.mxu0 0
    %973 = vmatpush1.bf16.msra.mxu0 0
    %974 = vmatprep.subr.bf16.mxu0 0
    %975 = vmatpush1.bf16.msra.mxu0 0
    %976 = vmatprep.subr.bf16.mxu0 0
    %977 = vmatpush1.bf16.msra.mxu0 0
    %978 = vmatprep.subr.bf16.mxu0 0
    %979 = vmatpush1.bf16.msra.mxu0 0
    %980 = vmatprep.subr.bf16.mxu0 0
    %981 = vmatpush1.bf16.msra.mxu0 0
    %982 = vmatprep.subr.bf16.mxu0 0
    %983 = vmatpush1.bf16.msra.mxu0 0
    %984 = vmatprep.subr.bf16.mxu0 0
    %985 = vmatpush1.bf16.msra.mxu0 0
    %986 = vmatprep.mubr.bf16.mxu0 0
    %987 = vmatmul.mubr.bf16.gmra.mrb[0].mxu0 %v953
    %v988 = vpop.f32.mrb[0].mxu0
    %v989 = vadd.f32 0.0, %v988
    %v990 = vpop.f32.mrb[0].mxu0
    %v991 = vpop.f32.mrb[0].mxu0
    %v992 = vpop.f32.mrb[0].mxu0
    %993 = vdwg.mxu0
    %v994 = vadd.f32 %v952, %v989
    %v995 = vtanh.pop %v994
    %v996 = vld [vmem:[%s415] sm:$0xff]
    %v997 = vpack.c.bf16 %v995, %v995
    %998 = vmatprep.subr.bf16.mxu0 0
    %999 = vmatpush1.bf16.msra.mxu0 %v806
    %1000 = vmatprep.subr.bf16.mxu0 0
    %1001 = vmatpush1.bf16.msra.mxu0 %v807
    %1002 = vmatprep.subr.bf16.mxu0 0
    %1003 = vmatpush1.bf16.msra.mxu0 %v808
    %1004 = vmatprep.subr.bf16.mxu0 0
    %1005 = vmatpush1.bf16.msra.mxu0 %v809
    %1006 = vmatprep.subr.bf16.mxu0 0
    %1007 = vmatpush1.bf16.msra.mxu0 %v810
    %1008 = vmatprep.subr.bf16.mxu0 0
    %1009 = vmatpush1.bf16.msra.mxu0 %v811
    %1010 = vmatprep.subr.bf16.mxu0 0
    %1011 = vmatpush1.bf16.msra.mxu0 %v812
    %1012 = vmatprep.subr.bf16.mxu0 0
    %1013 = vmatpush1.bf16.msra.mxu0 %v813
    %1014 = vmatprep.subr.bf16.mxu0 0
    %1015 = vmatpush1.bf16.msra.mxu0 0
    %1016 = vmatprep.subr.bf16.mxu0 0
    %1017 = vmatpush1.bf16.msra.mxu0 0
    %1018 = vmatprep.subr.bf16.mxu0 0
    %1019 = vmatpush1.bf16.msra.mxu0 0
    %1020 = vmatprep.subr.bf16.mxu0 0
    %1021 = vmatpush1.bf16.msra.mxu0 0
    %1022 = vmatprep.subr.bf16.mxu0 0
    %1023 = vmatpush1.bf16.msra.mxu0 0
    %1024 = vmatprep.subr.bf16.mxu0 0
    %1025 = vmatpush1.bf16.msra.mxu0 0
    %1026 = vmatprep.subr.bf16.mxu0 0
    %1027 = vmatpush1.bf16.msra.mxu0 0
    %1028 = vmatprep.subr.bf16.mxu0 0
    %1029 = vmatpush1.bf16.msra.mxu0 0
    %1030 = vmatprep.mubr.bf16.mxu0 0
    %1031 = vmatmul.mubr.bf16.gmra.mrb[0].mxu0 %v997
    %v1032 = vpop.f32.mrb[0].mxu0
    %v1033 = vadd.f32 0.0, %v1032
    %v1034 = vpop.f32.mrb[0].mxu0
    %v1035 = vpop.f32.mrb[0].mxu0
    %v1036 = vpop.f32.mrb[0].mxu0
    %1037 = vdwg.mxu0
    %v1038 = vadd.f32 %v996, %v1033
    %v1039 = vtanh.pop %v1038
    %v1040 = vld [vmem:[%s461] sm:$0xff]
    %v1041 = vpack.c.bf16 %v1039, %v1039
    %1042 = vmatprep.subr.bf16.mxu0 0
    %1043 = vmatpush1.bf16.msra.mxu0 %v806
    %1044 = vmatprep.subr.bf16.mxu0 0
    %1045 = vmatpush1.bf16.msra.mxu0 %v807
    %1046 = vmatprep.subr.bf16.mxu0 0
    %1047 = vmatpush1.bf16.msra.mxu0 %v808
    %1048 = vmatprep.subr.bf16.mxu0 0
    %1049 = vmatpush1.bf16.msra.mxu0 %v809
    %1050 = vmatprep.subr.bf16.mxu0 0
    %1051 = vmatpush1.bf16.msra.mxu0 %v810
    %1052 = vmatprep.subr.bf16.mxu0 0
    %1053 = vmatpush1.bf16.msra.mxu0 %v811
    %1054 = vmatprep.subr.bf16.mxu0 0
    %1055 = vmatpush1.bf16.msra.mxu0 %v812
    %1056 = vmatprep.subr.bf16.mxu0 0
    %1057 = vmatpush1.bf16.msra.mxu0 %v813
    %1058 = vmatprep.subr.bf16.mxu0 0
    %1059 = vmatpush1.bf16.msra.mxu0 0
    %1060 = vmatprep.subr.bf16.mxu0 0
    %1061 = vmatpush1.bf16.msra.mxu0 0
    %1062 = vmatprep.subr.bf16.mxu0 0
    %1063 = vmatpush1.bf16.msra.mxu0 0
    %1064 = vmatprep.subr.bf16.mxu0 0
    %1065 = vmatpush1.bf16.msra.mxu0 0
    %1066 = vmatprep.subr.bf16.mxu0 0
    %1067 = vmatpush1.bf16.msra.mxu0 0
    %1068 = vmatprep.subr.bf16.mxu0 0
    %1069 = vmatpush1.bf16.msra.mxu0 0
    %1070 = vmatprep.subr.bf16.mxu0 0
    %1071 = vmatpush1.bf16.msra.mxu0 0
    %1072 = vmatprep.subr.bf16.mxu0 0
    %1073 = vmatpush1.bf16.msra.mxu0 0
    %1074 = vmatprep.mubr.bf16.mxu0 0
    %1075 = vmatmul.mubr.bf16.gmra.mrb[0].mxu0 %v1041
    %v1076 = vpop.f32.mrb[0].mxu0
    %v1077 = vadd.f32 0.0, %v1076
    %v1078 = vpop.f32.mrb[0].mxu0
    %v1079 = vpop.f32.mrb[0].mxu0
    %v1080 = vpop.f32.mrb[0].mxu0
    %1081 = vdwg.mxu0
    %v1082 = vadd.f32 %v1040, %v1077
    %v1083 = vtanh.pop %v1082
    %v1084 = vld [vmem:[%s507] sm:$0xff]
    %v1085 = vpack.c.bf16 %v1083, %v1083
    %1086 = vmatprep.subr.bf16.mxu0 0
    %1087 = vmatpush1.bf16.msra.mxu0 %v806
    %1088 = vmatprep.subr.bf16.mxu0 0
    %1089 = vmatpush1.bf16.msra.mxu0 %v807
    %1090 = vmatprep.subr.bf16.mxu0 0
    %1091 = vmatpush1.bf16.msra.mxu0 %v808
    %1092 = vmatprep.subr.bf16.mxu0 0
    %1093 = vmatpush1.bf16.msra.mxu0 %v809
    %1094 = vmatprep.subr.bf16.mxu0 0
    %1095 = vmatpush1.bf16.msra.mxu0 %v810
    %1096 = vmatprep.subr.bf16.mxu0 0
    %1097 = vmatpush1.bf16.msra.mxu0 %v811
    %1098 = vmatprep.subr.bf16.mxu0 0
    %1099 = vmatpush1.bf16.msra.mxu0 %v812
    %1100 = vmatprep.subr.bf16.mxu0 0
    %1101 = vmatpush1.bf16.msra.mxu0 %v813
    %1102 = vmatprep.subr.bf16.mxu0 0
    %1103 = vmatpush1.bf16.msra.mxu0 0
    %1104 = vmatprep.subr.bf16.mxu0 0
    %1105 = vmatpush1.bf16.msra.mxu0 0
    %1106 = vmatprep.subr.bf16.mxu0 0
    %1107 = vmatpush1.bf16.msra.mxu0 0
    %1108 = vmatprep.subr.bf16.mxu0 0
    %1109 = vmatpush1.bf16.msra.mxu0 0
    %1110 = vmatprep.subr.bf16.mxu0 0
    %1111 = vmatpush1.bf16.msra.mxu0 0
    %1112 = vmatprep.subr.bf16.mxu0 0
    %1113 = vmatpush1.bf16.msra.mxu0 0
    %1114 = vmatprep.subr.bf16.mxu0 0
    %1115 = vmatpush1.bf16.msra.mxu0 0
    %1116 = vmatprep.subr.bf16.mxu0 0
    %1117 = vmatpush1.bf16.msra.mxu0 0
    %1118 = vmatprep.mubr.bf16.mxu0 0
    %1119 = vmatmul.mubr.bf16.gmra.mrb[0].mxu0 %v1085
    %v1120 = vpop.f32.mrb[0].mxu0
    %v1121 = vadd.f32 0.0, %v1120
    %v1122 = vpop.f32.mrb[0].mxu0
    %v1123 = vpop.f32.mrb[0].mxu0
    %v1124 = vpop.f32.mrb[0].mxu0
    %1125 = vdwg.mxu0
    %v1126 = vadd.f32 %v1084, %v1121
    %v1127 = vtanh.pop %v1126
    %v1128 = vld [vmem:[%s553] sm:$0xff]
    %v1129 = vpack.c.bf16 %v1127, %v1127
    %1130 = vmatprep.subr.bf16.mxu0 0
    %1131 = vmatpush1.bf16.msra.mxu0 %v806
    %1132 = vmatprep.subr.bf16.mxu0 0
    %1133 = vmatpush1.bf16.msra.mxu0 %v807
    %1134 = vmatprep.subr.bf16.mxu0 0
    %1135 = vmatpush1.bf16.msra.mxu0 %v808
    %1136 = vmatprep.subr.bf16.mxu0 0
    %1137 = vmatpush1.bf16.msra.mxu0 %v809
    %1138 = vmatprep.subr.bf16.mxu0 0
    %1139 = vmatpush1.bf16.msra.mxu0 %v810
    %1140 = vmatprep.subr.bf16.mxu0 0
    %1141 = vmatpush1.bf16.msra.mxu0 %v811
    %1142 = vmatprep.subr.bf16.mxu0 0
    %1143 = vmatpush1.bf16.msra.mxu0 %v812
    %1144 = vmatprep.subr.bf16.mxu0 0
    %1145 = vmatpush1.bf16.msra.mxu0 %v813
    %1146 = vmatprep.subr.bf16.mxu0 0
    %1147 = vmatpush1.bf16.msra.mxu0 0
    %1148 = vmatprep.subr.bf16.mxu0 0
    %1149 = vmatpush1.bf16.msra.mxu0 0
    %1150 = vmatprep.subr.bf16.mxu0 0
    %1151 = vmatpush1.bf16.msra.mxu0 0
    %1152 = vmatprep.subr.bf16.mxu0 0
    %1153 = vmatpush1.bf16.msra.mxu0 0
    %1154 = vmatprep.subr.bf16.mxu0 0
    %1155 = vmatpush1.bf16.msra.mxu0 0
    %1156 = vmatprep.subr.bf16.mxu0 0
    %1157 = vmatpush1.bf16.msra.mxu0 0
    %1158 = vmatprep.subr.bf16.mxu0 0
    %1159 = vmatpush1.bf16.msra.mxu0 0
    %1160 = vmatprep.subr.bf16.mxu0 0
    %1161 = vmatpush1.bf16.msra.mxu0 0
    %1162 = vmatprep.mubr.bf16.mxu0 0
    %1163 = vmatmul.mubr.bf16.gmra.mrb[0].mxu0 %v1129
    %v1164 = vpop.f32.mrb[0].mxu0
    %v1165 = vadd.f32 0.0, %v1164
    %v1166 = vpop.f32.mrb[0].mxu0
    %v1167 = vpop.f32.mrb[0].mxu0
    %v1168 = vpop.f32.mrb[0].mxu0
    %1169 = vdwg.mxu0
    %v1170 = vadd.f32 %v1128, %v1165
    %v1171 = vtanh.pop %v1170
    %v1172 = vld [vmem:[#allocation6] sm:$0xf]
    %v1173 = vld [vmem:[#allocation6 + $0x4] sm:$0xf]
    %v1174 = vld [vmem:[#allocation6 + $0x8] sm:$0xf]
    %v1175 = vld [vmem:[#allocation6 + $0xc] sm:$0xf]
    %v1176 = vld [vmem:[#allocation6 + $0x10] sm:$0xf]
    %v1177 = vld [vmem:[#allocation6 + $0x14] sm:$0xf]
    %v1178 = vld [vmem:[#allocation6 + $0x18] sm:$0xf]
    %v1179 = vld [vmem:[#allocation6 + $0x1c] sm:$0xf]
    %v1180 = vld [vmem:[#allocation6 + $0x20] sm:$0xf]
    %v1181 = vld [vmem:[#allocation6 + $0x24] sm:$0xf]
    %v1182 = vld [vmem:[#allocation6 + $0x28] sm:$0xf]
    %v1183 = vld [vmem:[#allocation6 + $0x2c] sm:$0xf]
    %v1184 = vld [vmem:[#allocation6 + $0x30] sm:$0xf]
    %v1185 = vld [vmem:[#allocation6 + $0x34] sm:$0xf]
    %v1186 = vld [vmem:[#allocation6 + $0x38] sm:$0xf]
    %v1187 = vld [vmem:[#allocation6 + $0x3c] sm:$0xf]
    %v1188 = vld [vmem:[%s6] sm:$0x1]
    %v1189 = vpack.c.bf16 %v1171, %v1171
    %v1191 = vlaneseq
    %v1192 = vshrl.u32 %v1191, 7
    %v1193 = vsub.s32 0, %v1192
    %v1194 = vrot.slane %v1188, %v1193
    %v1212 = vunpack.c.l.b16 %v1172
    %v1213 = vunpack.c.l.b16 %v1173
    %v1214 = vunpack.c.l.b16 %v1174
    %v1215 = vunpack.c.l.b16 %v1175
    %v1216 = vunpack.c.l.b16 %v1176
    %v1217 = vunpack.c.l.b16 %v1177
    %v1218 = vunpack.c.l.b16 %v1178
    %v1219 = vunpack.c.l.b16 %v1179
    %v1220 = vunpack.c.l.b16 %v1180
    %v1221 = vunpack.c.l.b16 %v1181
    %v1222 = vunpack.c.l.b16 %v1182
    %v1223 = vunpack.c.l.b16 %v1183
    %v1224 = vunpack.c.l.b16 %v1184
    %v1225 = vunpack.c.l.b16 %v1185
    %v1226 = vunpack.c.l.b16 %v1186
    %v1227 = vunpack.c.l.b16 %v1187
    %v1228 = vpack.c.b16 %v1213, %v1212
    %v1229 = vpack.c.b16 %v1215, %v1214
    %v1230 = vpack.c.b16 %v1217, %v1216
    %v1231 = vpack.c.b16 %v1219, %v1218
    %v1232 = vpack.c.b16 %v1221, %v1220
    %v1233 = vpack.c.b16 %v1223, %v1222
    %v1234 = vpack.c.b16 %v1225, %v1224
    %v1235 = vpack.c.b16 %v1227, %v1226
    %1244 = vmatprep.subr.bf16.mxu0 0
    %1245 = vmatpush1.bf16.msra.mxu0 %v1228
    %1246 = vmatprep.subr.bf16.mxu0 0
    %1247 = vmatpush1.bf16.msra.mxu0 %v1229
    %1248 = vmatprep.subr.bf16.mxu0 0
    %1249 = vmatpush1.bf16.msra.mxu0 %v1230
    %1250 = vmatprep.subr.bf16.mxu0 0
    %1251 = vmatpush1.bf16.msra.mxu0 %v1231
    %1252 = vmatprep.subr.bf16.mxu0 0
    %1253 = vmatpush1.bf16.msra.mxu0 %v1232
    %1254 = vmatprep.subr.bf16.mxu0 0
    %1255 = vmatpush1.bf16.msra.mxu0 %v1233
    %1256 = vmatprep.subr.bf16.mxu0 0
    %1257 = vmatpush1.bf16.msra.mxu0 %v1234
    %1258 = vmatprep.subr.bf16.mxu0 0
    %1259 = vmatpush1.bf16.msra.mxu0 %v1235
    %1260 = vmatprep.subr.bf16.mxu0 0
    %1261 = vmatpush1.bf16.msra.mxu0 0
    %1262 = vmatprep.subr.bf16.mxu0 0
    %1263 = vmatpush1.bf16.msra.mxu0 0
    %1264 = vmatprep.subr.bf16.mxu0 0
    %1265 = vmatpush1.bf16.msra.mxu0 0
    %1266 = vmatprep.subr.bf16.mxu0 0
    %1267 = vmatpush1.bf16.msra.mxu0 0
    %1268 = vmatprep.subr.bf16.mxu0 0
    %1269 = vmatpush1.bf16.msra.mxu0 0
    %1270 = vmatprep.subr.bf16.mxu0 0
    %1271 = vmatpush1.bf16.msra.mxu0 0
    %1272 = vmatprep.subr.bf16.mxu0 0
    %1273 = vmatpush1.bf16.msra.mxu0 0
    %1274 = vmatprep.subr.bf16.mxu0 0
    %1275 = vmatpush1.bf16.msra.mxu0 0
    %1276 = vmatprep.mubr.bf16.mxu0 0
    %1277 = vmatmul.mubr.bf16.gmra.mrb[0].mxu0 %v1189
    %v1278 = vpop.f32.mrb[0].mxu0
    %v1279 = vadd.f32 %v1194, %v1278
    %v1280 = vpop.f32.mrb[0].mxu0
    %v1281 = vpop.f32.mrb[0].mxu0
    %v1282 = vpop.f32.mrb[0].mxu0
    %1283 = vdwg.mxu0
    %1284 = vst [vmem:[#allocation8] sm:$0xff] %v1279
    // Predicated region
    $region38: #{tpu_custom_call.1} parent=1 // pred_check
      _
    $region39: #{tpu_custom_call.1} parent=1 // pred_check_branch
      %1286 = sbr.rel (0) target = $region41
    $region40: #{tpu_custom_call.1} parent=1 // pred_region
      %s1288 = ssub.s32 128, 128
      %1289 = vsyncadd [#allocation5], %s1288
      %s1291 = sshll.u32 [#allocation8], 4
      %s1292 = int_to_ptr.vmem [resolvable:$true] %s1291
      %1294 = dma.vmem_to_hbm [thread:$0]  %s1292, 128, %s7, [#allocation5]
    $region41: #{tpu_custom_call.1} parent=1 // pred_fallthru
      _
    // Predicated region
    $region42: #{tpu_custom_call.1} parent=1 // pred_check
      _
    $region43: #{tpu_custom_call.1} parent=1 // pred_check_branch
      %1296 = sbr.rel (0) target = $region45
    $region44: #{tpu_custom_call.1} parent=1 // pred_region
      %1297 = dma.done [#allocation5], 128
    $region45: #{tpu_custom_call.1} parent=1 // pred_fallthru
      _
    %1298 = vsyncpa [#allocation4], 1
    %1299 = vsyncpa [#allocation7], 1
    %1300 = vsyncpa [#allocation5], 1

</llo_original>
